<compile_context>
chip_gen: v5e
topology: v5e:2x2
jax: 0.10.0
libtpu: 0.0.40
codegen_flags: <defaults>
</compile_context>

<pallas_src>
import math
import jax
import jax.numpy as jnp
from jax import lax
from jax.experimental import pallas as pl
from jax.experimental.pallas import tpu as pltpu

L_IN = 30
K = 3
C1 = 16
C2 = 32
L_C1 = L_IN - (K - 1)      # 28 after conv1
L_P1 = L_C1 // 2           # 14 after pool1
L_C2 = L_P1 - (K - 1)      # 12 after conv2
L_P2 = L_C2 // 2           # 6  after pool2
FLAT = C2 * L_P2           # 192
N_OUT = 4
TB_MAX = 512               # max batch tile; multiple of 128


def cnn1_kernel(x_ref, w1b_ref, b1_ref, w2b_ref, b2_ref,
                fc1w_ref, fc1b_ref, fc2w_ref, fc2b_ref,
                x2_ref, out_ref):
    B = x_ref.shape[0]                               # TB (static)
    dn = (((1,), (0,)), ((), ()))                    # A(M,K) @ B(K,N)
    dn_bt = (((1,), (1,)), ((), ()))                 # A(M,K) @ B(N,K)^T

    # ---- conv1 + bias + ReLU as one banded MXU matmul ------------------------
    xb = x_ref[...].astype(jnp.bfloat16)             # (B, 30)
    z1 = lax.dot_general(w1b_ref[...], xb, dn_bt,
                         preferred_element_type=jnp.float32)     # (448, B)
    h = jnp.maximum(z1 + b1_ref[...], 0.0)           # f32 elementwise (v5e-safe)

    # ---- pool1: pair-max of adjacent positions (row = l*16 + c) --------------
    hr = h.reshape(L_P1, 2, C1, B)                   # leading-dim reshape: free
    hp = jnp.maximum(hr[:, 0], hr[:, 1])             # (14, 16, B)
    hp = hp.reshape(L_P1 * C1, B).astype(jnp.bfloat16)           # (224, B)

    # ---- conv2 (banded matmul) with pool2 fused as even/odd row-group max ----
    z2 = lax.dot_general(w2b_ref[...], hp, dn,
                         preferred_element_type=jnp.float32)     # (384, B)
    z2r = z2.reshape(L_P2, 2, C2, B)
    m = jnp.maximum(z2r[:, 0], z2r[:, 1])            # (6, 32, B)
    flat = jnp.maximum(m + b2_ref[...][None, :, :], 0.0)         # bias+ReLU once
    flat = flat.reshape(FLAT, B).astype(jnp.bfloat16)            # (192, B)

    # ---- fc1 (pre-ReLU activation is a kernel output) ------------------------
    x2_fm = lax.dot_general(fc1w_ref[...], flat, dn,
                            preferred_element_type=jnp.float32) + fc1b_ref[...]
    x2_bm = x2_fm.T                                  # in-VMEM transpose -> (B,192)
    x2_ref[...] = x2_bm                              # batch-major store

    # ---- fc2 on ReLU(x2) ------------------------------------------------------
    y = jnp.maximum(x2_bm, 0.0).astype(jnp.bfloat16)             # (B, 192)
    out_ref[...] = (lax.dot_general(y, fc2w_ref[...], dn_bt,
                                    preferred_element_type=jnp.float32)
                    + fc2b_ref[...])                 # (B, 4)


def _prep_params(params):
    """Convert PyTorch-layout parameters to the kernel's banded/bf16 layouts."""
    w1, b1, w2, b2, fc1w, fc1b, fc2w, fc2b = params

    # conv1 band: W1b[l*C1 + c, t] = w1[c, 0, t - l] for t-l in [0,K)
    shifts1 = jnp.stack([jnp.eye(L_C1, L_IN, k=k, dtype=jnp.float32)
                         for k in range(K)])                      # (K, 28, 30)
    w1k = jnp.transpose(w1[:, 0, :], (1, 0))                      # (K, C1)
    w1b = jnp.einsum('kc,klt->lct', w1k, shifts1).reshape(L_C1 * C1, L_IN)
    w1b = w1b.astype(jnp.bfloat16)                                # (448, 30)
    b1b = jnp.tile(b1, L_C1).reshape(L_C1 * C1, 1)                # (448, 1)

    # conv2 band: W2b[l*C2 + o, m*C1 + c] = w2[o, c, m - l] for m-l in [0,K)
    shifts2 = jnp.stack([jnp.eye(L_C2, L_P1, k=k, dtype=jnp.float32)
                         for k in range(K)])                      # (K, 12, 14)
    w2b = jnp.einsum('ock,klm->lomc', w2, shifts2).reshape(L_C2 * C2, L_P1 * C1)
    w2b = w2b.astype(jnp.bfloat16)                                # (384, 224)
    b2c = b2.reshape(C2, 1)

    # fc1: kernel flatten order is p*32 + c, torch order is c*6 + p.
    fc1wp = fc1w.reshape(FLAT, C2, L_P2).transpose(0, 2, 1).reshape(FLAT, FLAT)
    fc1wb = fc1wp.astype(jnp.bfloat16)                            # (192, 192)
    fc1bc = fc1b.reshape(FLAT, 1)
    fc2wb = fc2w.astype(jnp.bfloat16)                             # (4, 192)
    fc2br = fc2b.reshape(1, N_OUT)
    return w1b, b1b, w2b, b2c, fc1wb, fc1bc, fc2wb, fc2br


def _pick_tb(n):
    """Largest tile <= TB_MAX, but small enough that big batches keep >= 2
    grid steps (so v7x's two TensorCores both get work)."""
    half = -(-n // 2)
    tb = 128 * (-(-half // 128))
    return int(min(TB_MAX, max(128, tb)))


@jax.jit
def cnn1_forward(x, params):
    N = x.shape[0]
    TB = _pick_tb(N)
    npad = pl.cdiv(N, TB) * TB
    grid = (npad // TB,)

    x2d = jnp.pad(x[:, 0, :], ((0, npad - N), (0, 0)))            # (npad, 30)
    kparams = _prep_params(params)

    wspec = pl.BlockSpec(memory_space=pltpu.MemorySpace.VMEM)     # VMEM-resident
    flops = 2 * npad * (L_C1 * C1 * L_IN + L_C2 * C2 * L_P1 * C1
                        + FLAT * FLAT + N_OUT * FLAT)
    bytes_accessed = (npad * 4 * (L_IN + FLAT + N_OUT)
                      + 2 * (L_C1 * C1 * L_IN + L_C2 * C2 * L_P1 * C1
                             + FLAT * FLAT + N_OUT * FLAT))

    x2p, outp = pl.pallas_call(
        cnn1_kernel,
        out_shape=(jax.ShapeDtypeStruct((npad, FLAT), jnp.float32),
                   jax.ShapeDtypeStruct((npad, N_OUT), jnp.float32)),
        grid=grid,
        in_specs=[pl.BlockSpec((TB, L_IN), lambda i: (i, 0))] + [wspec] * 8,
        out_specs=(pl.BlockSpec((TB, FLAT), lambda i: (i, 0)),
                   pl.BlockSpec((TB, N_OUT), lambda i: (i, 0))),
        compiler_params=pltpu.CompilerParams(
            dimension_semantics=("parallel",),
            vmem_limit_bytes=32 * 1024 * 1024),
        cost_estimate=pl.CostEstimate(flops=flops, transcendentals=0,
                                      bytes_accessed=bytes_accessed),
    )(x2d, *kparams)

    return x2p[:N], outp[:N]                         # already batch-major


def ref_forward(x, params):
    """Pure-JAX f32 reference mirroring the PyTorch module exactly."""
    w1, b1, w2, b2, fc1w, fc1b, fc2w, fc2b = params
    N = x.shape[0]
    xs = x[:, 0, :]                                                     # (N,30)
    h = sum(xs[:, None, k:k + L_C1] * w1[None, :, 0, k:k + 1] for k in range(K))
    h = jnp.maximum(h + b1[None, :, None], 0.0)                         # (N,16,28)
    hp = jnp.max(h.reshape(N, C1, L_P1, 2), axis=-1)                    # (N,16,14)
    h2 = sum(jnp.einsum('ncl,oc->nol', hp[:, :, k:k + L_C2], w2[:, :, k])
             for k in range(K))
    h2 = jnp.maximum(h2 + b2[None, :, None], 0.0)                       # (N,32,12)
    hp2 = jnp.max(h2.reshape(N, C2, L_P2, 2), axis=-1)                  # (N,32,6)
    flat = hp2.reshape(N, FLAT)
    x2 = flat @ fc1w.T + fc1b
    out = jnp.maximum(x2, 0.0) @ fc2w.T + fc2b
    return x2, out


def init_params(key):
    """Deterministic PyTorch-style init: U(-1/sqrt(fan_in), 1/sqrt(fan_in))."""
    ks = jax.random.split(key, 8)

    def u(k, shape, fan_in):
        b = 1.0 / math.sqrt(fan_in)
        return jax.random.uniform(k, shape, jnp.float32, -b, b)

    w1 = u(ks[0], (C1, 1, K), 1 * K)        # conv1.weight (out, in, k)
    b1 = u(ks[1], (C1,), 1 * K)
    w2 = u(ks[2], (C2, C1, K), C1 * K)      # conv2.weight (out, in, k)
    b2 = u(ks[3], (C2,), C1 * K)
    fc1w = u(ks[4], (FLAT, FLAT), FLAT)     # (out, in), torch layout
    fc1b = u(ks[5], (FLAT,), FLAT)
    fc2w = u(ks[6], (N_OUT, FLAT), FLAT)    # (out, in), torch layout
    fc2b = u(ks[7], (N_OUT,), FLAT)
    return (w1, b1, w2, b2, fc1w, fc1b, fc2w, fc2b)


if __name__ == "__main__":
    key = jax.random.PRNGKey(0)
    pkey, xkey = jax.random.split(key)
    params = init_params(pkey)
    x = jax.random.normal(xkey, (2, 1, L_IN), jnp.float32)   # (N, C=1, L=30)

    x2, out = cnn1_forward(x, params)
    jax.block_until_ready((x2, out))

    x2_ref, out_ref_ = ref_forward(x, params)
    assert x2.shape == (2, FLAT) and out.shape == (2, N_OUT)
    # conv1/conv2/fc1/fc2 all use bf16 MXU operands (f32 accumulation)
    # -> bf16-level tolerance vs. the f32 reference.
    assert jnp.allclose(x2, x2_ref, atol=2e-2, rtol=2e-2), \
        float(jnp.max(jnp.abs(x2 - x2_ref)))
    assert jnp.allclose(out, out_ref_, atol=2e-2, rtol=2e-2), \
        float(jnp.max(jnp.abs(out - out_ref_)))

    print("KERNEL_OK")
</pallas_src>

<mosaic_0001>
module attributes {stable_mosaic.version = 11 : i64} {
  func.func @cnn1_kernel(%arg0: i32, %arg1: memref<128x30xf32, #tpu.memory_space<vmem>>, %arg2: memref<448x30xbf16, #tpu.memory_space<vmem>>, %arg3: memref<448x1xf32, #tpu.memory_space<vmem>>, %arg4: memref<384x224xbf16, #tpu.memory_space<vmem>>, %arg5: memref<32x1xf32, #tpu.memory_space<vmem>>, %arg6: memref<192x192xbf16, #tpu.memory_space<vmem>>, %arg7: memref<192x1xf32, #tpu.memory_space<vmem>>, %arg8: memref<4x192xbf16, #tpu.memory_space<vmem>>, %arg9: memref<1x4xf32, #tpu.memory_space<vmem>>, %arg10: memref<128x192xf32, #tpu.memory_space<vmem>>, %arg11: memref<128x4xf32, #tpu.memory_space<vmem>>) attributes {dimension_semantics = [#tpu.dimension_semantics<parallel>], iteration_bounds = array<i64: 1>, scalar_prefetch = 0 : i64, scratch_operands = 0 : i64, tpu.core_type = #tpu.core_type<tc>, window_params = [{transform_indices = @transform_0, window_bounds = array<i64: 128, 30>}, {pipeline_mode = #tpu.pipeline_mode<synchronous>, transform_indices = @transform_1, window_bounds = array<i64: 448, 30>}, {pipeline_mode = #tpu.pipeline_mode<synchronous>, transform_indices = @transform_2, window_bounds = array<i64: 448, 1>}, {pipeline_mode = #tpu.pipeline_mode<synchronous>, transform_indices = @transform_3, window_bounds = array<i64: 384, 224>}, {pipeline_mode = #tpu.pipeline_mode<synchronous>, transform_indices = @transform_4, window_bounds = array<i64: 32, 1>}, {pipeline_mode = #tpu.pipeline_mode<synchronous>, transform_indices = @transform_5, window_bounds = array<i64: 192, 192>}, {pipeline_mode = #tpu.pipeline_mode<synchronous>, transform_indices = @transform_6, window_bounds = array<i64: 192, 1>}, {pipeline_mode = #tpu.pipeline_mode<synchronous>, transform_indices = @transform_7, window_bounds = array<i64: 4, 192>}, {pipeline_mode = #tpu.pipeline_mode<synchronous>, transform_indices = @transform_8, window_bounds = array<i64: 1, 4>}, {transform_indices = @transform_9, window_bounds = array<i64: 128, 192>}, {transform_indices = @transform_10, window_bounds = array<i64: 128, 4>}]} {
    %c0 = arith.constant 0 : index
    %c0_0 = arith.constant 0 : index
    %0 = vector.load %arg1[%c0, %c0_0] : memref<128x30xf32, #tpu.memory_space<vmem>>, vector<128x30xf32>
    %1 = arith.truncf %0 : vector<128x30xf32> to vector<128x30xbf16>
    %c0_1 = arith.constant 0 : index
    %c0_2 = arith.constant 0 : index
    %2 = vector.load %arg2[%c0_1, %c0_2] : memref<448x30xbf16, #tpu.memory_space<vmem>>, vector<448x30xbf16>
    %cst = arith.constant dense<0.000000e+00> : vector<448x128xf32>
    %3 = tpu.matmul %2, %1, %cst {dimension_numbers = #tpu.dot_dimension_numbers<[1], [1], [0], [0], [0, 0, 1, 0], [], []>} : vector<448x30xbf16>, vector<128x30xbf16>, vector<448x128xf32> -> vector<448x128xf32>
    %c0_3 = arith.constant 0 : index
    %c0_4 = arith.constant 0 : index
    %4 = vector.load %arg3[%c0_3, %c0_4] : memref<448x1xf32, #tpu.memory_space<vmem>>, vector<448x1xf32>
    %5 = vector.broadcast %4 : vector<448x1xf32> to vector<448x128xf32>
    %6 = arith.addf %3, %5 : vector<448x128xf32>
    %cst_5 = arith.constant 0.000000e+00 : f32
    %7 = vector.broadcast %cst_5 : f32 to vector<448x128xf32>
    %8 = arith.maximumf %6, %7 : vector<448x128xf32>
    %9 = vector.shape_cast %8 : vector<448x128xf32> to vector<14x2x16x128xf32>
    %10 = vector.extract_strided_slice %9 {offsets = [0, 0, 0, 0], sizes = [14, 1, 16, 128], strides = [1, 1, 1, 1]} : vector<14x2x16x128xf32> to vector<14x1x16x128xf32>
    %11 = vector.shape_cast %10 : vector<14x1x16x128xf32> to vector<14x16x128xf32>
    %12 = vector.extract_strided_slice %9 {offsets = [0, 1, 0, 0], sizes = [14, 1, 16, 128], strides = [1, 1, 1, 1]} : vector<14x2x16x128xf32> to vector<14x1x16x128xf32>
    %13 = vector.shape_cast %12 : vector<14x1x16x128xf32> to vector<14x16x128xf32>
    %14 = arith.maximumf %11, %13 : vector<14x16x128xf32>
    %15 = vector.shape_cast %14 : vector<14x16x128xf32> to vector<224x128xf32>
    %16 = arith.truncf %15 : vector<224x128xf32> to vector<224x128xbf16>
    %c0_6 = arith.constant 0 : index
    %c0_7 = arith.constant 0 : index
    %17 = vector.load %arg4[%c0_6, %c0_7] : memref<384x224xbf16, #tpu.memory_space<vmem>>, vector<384x224xbf16>
    %cst_8 = arith.constant dense<0.000000e+00> : vector<384x128xf32>
    %18 = tpu.matmul %17, %16, %cst_8 {dimension_numbers = #tpu.dot_dimension_numbers<[1], [0], [0], [1], [0, 0, 1, 1], [], []>} : vector<384x224xbf16>, vector<224x128xbf16>, vector<384x128xf32> -> vector<384x128xf32>
    %19 = vector.shape_cast %18 : vector<384x128xf32> to vector<6x2x32x128xf32>
    %20 = vector.extract_strided_slice %19 {offsets = [0, 0, 0, 0], sizes = [6, 1, 32, 128], strides = [1, 1, 1, 1]} : vector<6x2x32x128xf32> to vector<6x1x32x128xf32>
    %21 = vector.shape_cast %20 : vector<6x1x32x128xf32> to vector<6x32x128xf32>
    %22 = vector.extract_strided_slice %19 {offsets = [0, 1, 0, 0], sizes = [6, 1, 32, 128], strides = [1, 1, 1, 1]} : vector<6x2x32x128xf32> to vector<6x1x32x128xf32>
    %23 = vector.shape_cast %22 : vector<6x1x32x128xf32> to vector<6x32x128xf32>
    %24 = arith.maximumf %21, %23 : vector<6x32x128xf32>
    %c0_9 = arith.constant 0 : index
    %c0_10 = arith.constant 0 : index
    %25 = vector.load %arg5[%c0_9, %c0_10] : memref<32x1xf32, #tpu.memory_space<vmem>>, vector<32x1xf32>
    %26 = vector.shape_cast %25 : vector<32x1xf32> to vector<1x32x1xf32>
    %27 = vector.broadcast %26 : vector<1x32x1xf32> to vector<6x32x128xf32>
    %28 = arith.addf %24, %27 : vector<6x32x128xf32>
    %cst_11 = arith.constant 0.000000e+00 : f32
    %29 = vector.broadcast %cst_11 : f32 to vector<6x32x128xf32>
    %30 = arith.maximumf %28, %29 : vector<6x32x128xf32>
    %31 = vector.shape_cast %30 : vector<6x32x128xf32> to vector<192x128xf32>
    %32 = arith.truncf %31 : vector<192x128xf32> to vector<192x128xbf16>
    %c0_12 = arith.constant 0 : index
    %c0_13 = arith.constant 0 : index
    %33 = vector.load %arg6[%c0_12, %c0_13] : memref<192x192xbf16, #tpu.memory_space<vmem>>, vector<192x192xbf16>
    %cst_14 = arith.constant dense<0.000000e+00> : vector<192x128xf32>
    %34 = tpu.matmul %33, %32, %cst_14 {dimension_numbers = #tpu.dot_dimension_numbers<[1], [0], [0], [1], [0, 0, 1, 1], [], []>} : vector<192x192xbf16>, vector<192x128xbf16>, vector<192x128xf32> -> vector<192x128xf32>
    %c0_15 = arith.constant 0 : index
    %c0_16 = arith.constant 0 : index
    %35 = vector.load %arg7[%c0_15, %c0_16] : memref<192x1xf32, #tpu.memory_space<vmem>>, vector<192x1xf32>
    %36 = vector.broadcast %35 : vector<192x1xf32> to vector<192x128xf32>
    %37 = arith.addf %34, %36 : vector<192x128xf32>
    %38 = tpu.transpose %37, [1, 0] : vector<192x128xf32> -> vector<128x192xf32>
    %c0_17 = arith.constant 0 : index
    %c0_18 = arith.constant 0 : index
    %39 = vector.load %arg10[%c0_17, %c0_18] : memref<128x192xf32, #tpu.memory_space<vmem>>, vector<128x192xf32>
    tpu.vector_store %arg10[%c0_17, %c0_18], %38 {strides = array<i32>} : memref<128x192xf32, #tpu.memory_space<vmem>>, vector<128x192xf32>,
    %cst_19 = arith.constant 0.000000e+00 : f32
    %40 = vector.broadcast %cst_19 : f32 to vector<128x192xf32>
    %41 = arith.maximumf %38, %40 : vector<128x192xf32>
    %42 = arith.truncf %41 : vector<128x192xf32> to vector<128x192xbf16>
    %c0_20 = arith.constant 0 : index
    %c0_21 = arith.constant 0 : index
    %43 = vector.load %arg8[%c0_20, %c0_21] : memref<4x192xbf16, #tpu.memory_space<vmem>>, vector<4x192xbf16>
    %cst_22 = arith.constant dense<0.000000e+00> : vector<128x4xf32>
    %44 = tpu.matmul %42, %43, %cst_22 {dimension_numbers = #tpu.dot_dimension_numbers<[1], [1], [0], [0], [0, 0, 1, 0], [], []>} : vector<128x192xbf16>, vector<4x192xbf16>, vector<128x4xf32> -> vector<128x4xf32>
    %c0_23 = arith.constant 0 : index
    %c0_24 = arith.constant 0 : index
    %45 = vector.load %arg9[%c0_23, %c0_24] : memref<1x4xf32, #tpu.memory_space<vmem>>, vector<1x4xf32>
    %46 = vector.broadcast %45 : vector<1x4xf32> to vector<128x4xf32>
    %47 = arith.addf %44, %46 : vector<128x4xf32>
    %c0_25 = arith.constant 0 : index
    %c0_26 = arith.constant 0 : index
    %48 = vector.load %arg11[%c0_25, %c0_26] : memref<128x4xf32, #tpu.memory_space<vmem>>, vector<128x4xf32>
    tpu.vector_store %arg11[%c0_25, %c0_26], %47 {strides = array<i32>} : memref<128x4xf32, #tpu.memory_space<vmem>>, vector<128x4xf32>,
    return
  }
  func.func @transform_0(%arg0: i32) -> (i32, i32) {
    %c0_i32 = arith.constant 0 : i32
    %c0_i32_0 = arith.constant 0 : i32
    return %arg0, %c0_i32 : i32, i32
  }
  func.func @transform_1(%arg0: i32) -> (i32, i32) {
    %c0_i32 = arith.constant 0 : i32
    %c0_i32_0 = arith.constant 0 : i32
    %c0_i32_1 = arith.constant 0 : i32
    return %c0_i32, %c0_i32_0 : i32, i32
  }
  func.func @transform_2(%arg0: i32) -> (i32, i32) {
    %c0_i32 = arith.constant 0 : i32
    %c0_i32_0 = arith.constant 0 : i32
    %c0_i32_1 = arith.constant 0 : i32
    return %c0_i32, %c0_i32_0 : i32, i32
  }
  func.func @transform_3(%arg0: i32) -> (i32, i32) {
    %c0_i32 = arith.constant 0 : i32
    %c0_i32_0 = arith.constant 0 : i32
    %c0_i32_1 = arith.constant 0 : i32
    return %c0_i32, %c0_i32_0 : i32, i32
  }
  func.func @transform_4(%arg0: i32) -> (i32, i32) {
    %c0_i32 = arith.constant 0 : i32
    %c0_i32_0 = arith.constant 0 : i32
    %c0_i32_1 = arith.constant 0 : i32
    return %c0_i32, %c0_i32_0 : i32, i32
  }
  func.func @transform_5(%arg0: i32) -> (i32, i32) {
    %c0_i32 = arith.constant 0 : i32
    %c0_i32_0 = arith.constant 0 : i32
    %c0_i32_1 = arith.constant 0 : i32
    return %c0_i32, %c0_i32_0 : i32, i32
  }
  func.func @transform_6(%arg0: i32) -> (i32, i32) {
    %c0_i32 = arith.constant 0 : i32
    %c0_i32_0 = arith.constant 0 : i32
    %c0_i32_1 = arith.constant 0 : i32
    return %c0_i32, %c0_i32_0 : i32, i32
  }
  func.func @transform_7(%arg0: i32) -> (i32, i32) {
    %c0_i32 = arith.constant 0 : i32
    %c0_i32_0 = arith.constant 0 : i32
    %c0_i32_1 = arith.constant 0 : i32
    return %c0_i32, %c0_i32_0 : i32, i32
  }
  func.func @transform_8(%arg0: i32) -> (i32, i32) {
    %c0_i32 = arith.constant 0 : i32
    %c0_i32_0 = arith.constant 0 : i32
    %c0_i32_1 = arith.constant 0 : i32
    return %c0_i32, %c0_i32_0 : i32, i32
  }
  func.func @transform_9(%arg0: i32) -> (i32, i32) {
    %c0_i32 = arith.constant 0 : i32
    %c0_i32_0 = arith.constant 0 : i32
    return %arg0, %c0_i32 : i32, i32
  }
  func.func @transform_10(%arg0: i32) -> (i32, i32) {
    %c0_i32 = arith.constant 0 : i32
    %c0_i32_0 = arith.constant 0 : i32
    return %arg0, %c0_i32 : i32, i32
  }
}

</mosaic_0001>

<llo_original>
// kernel: tile.8
$region0: #{tile.8}
  #allocation0 [shape = 's32[1]{0}', space=sflag, size = 0x4, scoped, tag = 'scoped memory for tile.8']
  %s0 = inlined_call_operand.vmem [shape: f32[16], index: 0, kind: input, shape index: {}]
  %s1 = inlined_call_operand.vmem [shape: f32[28,16], index: 1, kind: output, shape index: {}]
  // Predicated region
  $region2: #{tile.8} parent=0 // pred_check
    _
  $region3: #{tile.8} parent=0 // pred_check_branch
    %3 = sbr.rel (0) target = $region5
  $region4: #{tile.8} parent=0 // pred_region
    _
  $region5: #{tile.8} parent=0 // pred_fallthru
    _
  %v4 = vld [vmem:[%s0] ss:$0 sm:$0xff]
  %5 = vst [vmem:[%s1] sm:$0xff] %v4
  %s6 = scalar_lea.vmem %s1, 8
  %7 = vst [vmem:[%s6] sm:$0xff] %v4
  %s8 = scalar_lea.vmem %s1, 16
  %9 = vst [vmem:[%s8] sm:$0xff] %v4
  %s10 = scalar_lea.vmem %s1, 24
  %11 = vst [vmem:[%s10] sm:$0xff] %v4

// kernel: tile.0
$region0: #{tile.0}
  %s0 = inlined_call_operand.vmem [shape: f32[28,16], index: 0, kind: input, shape index: {}]
  %s1 = inlined_call_operand.vmem [shape: f32[448,1], index: 1, kind: output, shape index: {}]
  %v2 = vld [vmem:[%s0] sm:$0xff]
  %vm3 = vcmask 7168
  %4 = vst.msk [vmem:[%s1] ss:$16 sm:$0x3] %vm3, %v2
  %5 = vst.msk [vmem:[%s1] ss:$16 sm:$0xc] %vm3, %v2
  %6 = vst.msk [vmem:[%s1] ss:$16 sm:$0x30] %vm3, %v2
  %7 = vst.msk [vmem:[%s1] ss:$16 sm:$0xc0] %vm3, %v2
  %s8 = scalar_lea.vmem %s0, 8
  %v9 = vld [vmem:[%s8] sm:$0xff]
  %vm10 = vcmask 7168
  %s11 = scalar_lea.vmem %s1, 128
  %12 = vst.msk [vmem:[%s11] ss:$16 sm:$0x3] %vm10, %v9
  %s13 = scalar_lea.vmem %s1, 128
  %14 = vst.msk [vmem:[%s13] ss:$16 sm:$0xc] %vm10, %v9
  %s15 = scalar_lea.vmem %s1, 128
  %16 = vst.msk [vmem:[%s15] ss:$16 sm:$0x30] %vm10, %v9
  %s17 = scalar_lea.vmem %s1, 128
  %18 = vst.msk [vmem:[%s17] ss:$16 sm:$0xc0] %vm10, %v9
  %s19 = scalar_lea.vmem %s0, 16
  %v20 = vld [vmem:[%s19] sm:$0xff]
  %vm21 = vcmask 7168
  %s22 = scalar_lea.vmem %s1, 256
  %23 = vst.msk [vmem:[%s22] ss:$16 sm:$0x3] %vm21, %v20
  %s24 = scalar_lea.vmem %s1, 256
  %25 = vst.msk [vmem:[%s24] ss:$16 sm:$0xc] %vm21, %v20
  %s26 = scalar_lea.vmem %s1, 256
  %27 = vst.msk [vmem:[%s26] ss:$16 sm:$0x30] %vm21, %v20
  %s28 = scalar_lea.vmem %s1, 256
  %29 = vst.msk [vmem:[%s28] ss:$16 sm:$0xc0] %vm21, %v20
  %s30 = scalar_lea.vmem %s0, 24
  %v31 = vld [vmem:[%s30] sm:$0xf]
  %vm32 = vcmask 7168
  %s33 = scalar_lea.vmem %s1, 384
  %34 = vst.msk [vmem:[%s33] ss:$16 sm:$0x3] %vm32, %v31
  %s35 = scalar_lea.vmem %s1, 384
  %36 = vst.msk [vmem:[%s35] ss:$16 sm:$0xc] %vm32, %v31
  %v37 = vld [vmem:[%s0] sm:$0xff]
  %38 = vrot.lane.b32.xlu0 %v37, 127
  %v39 = vpop.permute.xlu0 %38
  %vm40 = vcmask 7168
  %s41 = scalar_lea.vmem %s1, 1
  %42 = vst.msk [vmem:[%s41] ss:$16 sm:$0x3] %vm40, %v39
  %s43 = scalar_lea.vmem %s1, 1
  %44 = vst.msk [vmem:[%s43] ss:$16 sm:$0xc] %vm40, %v39
  %s45 = scalar_lea.vmem %s1, 1
  %46 = vst.msk [vmem:[%s45] ss:$16 sm:$0x30] %vm40, %v39
  %s47 = scalar_lea.vmem %s1, 1
  %48 = vst.msk [vmem:[%s47] ss:$16 sm:$0xc0] %vm40, %v39
  %s49 = scalar_lea.vmem %s0, 8
  %v50 = vld [vmem:[%s49] sm:$0xff]
  %51 = vrot.lane.b32.xlu0 %v50, 127
  %v52 = vpop.permute.xlu0 %51
  %vm53 = vcmask 7168
  %s54 = scalar_lea.vmem %s1, 129
  %55 = vst.msk [vmem:[%s54] ss:$16 sm:$0x3] %vm53, %v52
  %s56 = scalar_lea.vmem %s1, 129
  %57 = vst.msk [vmem:[%s56] ss:$16 sm:$0xc] %vm53, %v52
  %s58 = scalar_lea.vmem %s1, 129
  %59 = vst.msk [vmem:[%s58] ss:$16 sm:$0x30] %vm53, %v52
  %s60 = scalar_lea.vmem %s1, 129
  %61 = vst.msk [vmem:[%s60] ss:$16 sm:$0xc0] %vm53, %v52
  %s62 = scalar_lea.vmem %s0, 16
  %v63 = vld [vmem:[%s62] sm:$0xff]
  %64 = vrot.lane.b32.xlu0 %v63, 127
  %v65 = vpop.permute.xlu0 %64
  %vm66 = vcmask 7168
  %s67 = scalar_lea.vmem %s1, 257
  %68 = vst.msk [vmem:[%s67] ss:$16 sm:$0x3] %vm66, %v65
  %s69 = scalar_lea.vmem %s1, 257
  %70 = vst.msk [vmem:[%s69] ss:$16 sm:$0xc] %vm66, %v65
  %s71 = scalar_lea.vmem %s1, 257
  %72 = vst.msk [vmem:[%s71] ss:$16 sm:$0x30] %vm66, %v65
  %s73 = scalar_lea.vmem %s1, 257
  %74 = vst.msk [vmem:[%s73] ss:$16 sm:$0xc0] %vm66, %v65
  %s75 = scalar_lea.vmem %s0, 24
  %v76 = vld [vmem:[%s75] sm:$0xf]
  %77 = vrot.lane.b32.xlu0 %v76, 127
  %v78 = vpop.permute.xlu0 %77
  %vm79 = vcmask 7168
  %s80 = scalar_lea.vmem %s1, 385
  %81 = vst.msk [vmem:[%s80] ss:$16 sm:$0x3] %vm79, %v78
  %s82 = scalar_lea.vmem %s1, 385
  %83 = vst.msk [vmem:[%s82] ss:$16 sm:$0xc] %vm79, %v78
  %v84 = vld [vmem:[%s0] sm:$0xff]
  %85 = vrot.lane.b32.xlu0 %v84, 126
  %v86 = vpop.permute.xlu0 %85
  %vm87 = vcmask 7168
  %s88 = scalar_lea.vmem %s1, 2
  %89 = vst.msk [vmem:[%s88] ss:$16 sm:$0x3] %vm87, %v86
  %s90 = scalar_lea.vmem %s1, 2
  %91 = vst.msk [vmem:[%s90] ss:$16 sm:$0xc] %vm87, %v86
  %s92 = scalar_lea.vmem %s1, 2
  %93 = vst.msk [vmem:[%s92] ss:$16 sm:$0x30] %vm87, %v86
  %s94 = scalar_lea.vmem %s1, 2
  %95 = vst.msk [vmem:[%s94] ss:$16 sm:$0xc0] %vm87, %v86
  %s96 = scalar_lea.vmem %s0, 8
  %v97 = vld [vmem:[%s96] sm:$0xff]
  %98 = vrot.lane.b32.xlu0 %v97, 126
  %v99 = vpop.permute.xlu0 %98
  %vm100 = vcmask 7168
  %s101 = scalar_lea.vmem %s1, 130
  %102 = vst.msk [vmem:[%s101] ss:$16 sm:$0x3] %vm100, %v99
  %s103 = scalar_lea.vmem %s1, 130
  %104 = vst.msk [vmem:[%s103] ss:$16 sm:$0xc] %vm100, %v99
  %s105 = scalar_lea.vmem %s1, 130
  %106 = vst.msk [vmem:[%s105] ss:$16 sm:$0x30] %vm100, %v99
  %s107 = scalar_lea.vmem %s1, 130
  %108 = vst.msk [vmem:[%s107] ss:$16 sm:$0xc0] %vm100, %v99
  %s109 = scalar_lea.vmem %s0, 16
  %v110 = vld [vmem:[%s109] sm:$0xff]
  %111 = vrot.lane.b32.xlu0 %v110, 126
  %v112 = vpop.permute.xlu0 %111
  %vm113 = vcmask 7168
  %s114 = scalar_lea.vmem %s1, 258
  %115 = vst.msk [vmem:[%s114] ss:$16 sm:$0x3] %vm113, %v112
  %s116 = scalar_lea.vmem %s1, 258
  %117 = vst.msk [vmem:[%s116] ss:$16 sm:$0xc] %vm113, %v112
  %s118 = scalar_lea.vmem %s1, 258
  %119 = vst.msk [vmem:[%s118] ss:$16 sm:$0x30] %vm113, %v112
  %s120 = scalar_lea.vmem %s1, 258
  %121 = vst.msk [vmem:[%s120] ss:$16 sm:$0xc0] %vm113, %v112
  %s122 = scalar_lea.vmem %s0, 24
  %v123 = vld [vmem:[%s122] sm:$0xf]
  %124 = vrot.lane.b32.xlu0 %v123, 126
  %v125 = vpop.permute.xlu0 %124
  %vm126 = vcmask 7168
  %s127 = scalar_lea.vmem %s1, 386
  %128 = vst.msk [vmem:[%s127] ss:$16 sm:$0x3] %vm126, %v125
  %s129 = scalar_lea.vmem %s1, 386
  %130 = vst.msk [vmem:[%s129] ss:$16 sm:$0xc] %vm126, %v125
  %v131 = vld [vmem:[%s0] sm:$0xff]
  %132 = vrot.lane.b32.xlu0 %v131, 125
  %v133 = vpop.permute.xlu0 %132
  %vm134 = vcmask 7168
  %s135 = scalar_lea.vmem %s1, 3
  %136 = vst.msk [vmem:[%s135] ss:$16 sm:$0x3] %vm134, %v133
  %s137 = scalar_lea.vmem %s1, 3
  %138 = vst.msk [vmem:[%s137] ss:$16 sm:$0xc] %vm134, %v133
  %s139 = scalar_lea.vmem %s1, 3
  %140 = vst.msk [vmem:[%s139] ss:$16 sm:$0x30] %vm134, %v133
  %s141 = scalar_lea.vmem %s1, 3
  %142 = vst.msk [vmem:[%s141] ss:$16 sm:$0xc0] %vm134, %v133
  %s143 = scalar_lea.vmem %s0, 8
  %v144 = vld [vmem:[%s143] sm:$0xff]
  %145 = vrot.lane.b32.xlu0 %v144, 125
  %v146 = vpop.permute.xlu0 %145
  %vm147 = vcmask 7168
  %s148 = scalar_lea.vmem %s1, 131
  %149 = vst.msk [vmem:[%s148] ss:$16 sm:$0x3] %vm147, %v146
  %s150 = scalar_lea.vmem %s1, 131
  %151 = vst.msk [vmem:[%s150] ss:$16 sm:$0xc] %vm147, %v146
  %s152 = scalar_lea.vmem %s1, 131
  %153 = vst.msk [vmem:[%s152] ss:$16 sm:$0x30] %vm147, %v146
  %s154 = scalar_lea.vmem %s1, 131
  %155 = vst.msk [vmem:[%s154] ss:$16 sm:$0xc0] %vm147, %v146
  %s156 = scalar_lea.vmem %s0, 16
  %v157 = vld [vmem:[%s156] sm:$0xff]
  %158 = vrot.lane.b32.xlu0 %v157, 125
  %v159 = vpop.permute.xlu0 %158
  %vm160 = vcmask 7168
  %s161 = scalar_lea.vmem %s1, 259
  %162 = vst.msk [vmem:[%s161] ss:$16 sm:$0x3] %vm160, %v159
  %s163 = scalar_lea.vmem %s1, 259
  %164 = vst.msk [vmem:[%s163] ss:$16 sm:$0xc] %vm160, %v159
  %s165 = scalar_lea.vmem %s1, 259
  %166 = vst.msk [vmem:[%s165] ss:$16 sm:$0x30] %vm160, %v159
  %s167 = scalar_lea.vmem %s1, 259
  %168 = vst.msk [vmem:[%s167] ss:$16 sm:$0xc0] %vm160, %v159
  %s169 = scalar_lea.vmem %s0, 24
  %v170 = vld [vmem:[%s169] sm:$0xf]
  %171 = vrot.lane.b32.xlu0 %v170, 125
  %v172 = vpop.permute.xlu0 %171
  %vm173 = vcmask 7168
  %s174 = scalar_lea.vmem %s1, 387
  %175 = vst.msk [vmem:[%s174] ss:$16 sm:$0x3] %vm173, %v172
  %s176 = scalar_lea.vmem %s1, 387
  %177 = vst.msk [vmem:[%s176] ss:$16 sm:$0xc] %vm173, %v172
  %v178 = vld [vmem:[%s0] sm:$0xff]
  %179 = vrot.lane.b32.xlu0 %v178, 124
  %v180 = vpop.permute.xlu0 %179
  %vm181 = vcmask 7168
  %s182 = scalar_lea.vmem %s1, 4
  %183 = vst.msk [vmem:[%s182] ss:$16 sm:$0x3] %vm181, %v180
  %s184 = scalar_lea.vmem %s1, 4
  %185 = vst.msk [vmem:[%s184] ss:$16 sm:$0xc] %vm181, %v180
  %s186 = scalar_lea.vmem %s1, 4
  %187 = vst.msk [vmem:[%s186] ss:$16 sm:$0x30] %vm181, %v180
  %s188 = scalar_lea.vmem %s1, 4
  %189 = vst.msk [vmem:[%s188] ss:$16 sm:$0xc0] %vm181, %v180
  %s190 = scalar_lea.vmem %s0, 8
  %v191 = vld [vmem:[%s190] sm:$0xff]
  %192 = vrot.lane.b32.xlu0 %v191, 124
  %v193 = vpop.permute.xlu0 %192
  %vm194 = vcmask 7168
  %s195 = scalar_lea.vmem %s1, 132
  %196 = vst.msk [vmem:[%s195] ss:$16 sm:$0x3] %vm194, %v193
  %s197 = scalar_lea.vmem %s1, 132
  %198 = vst.msk [vmem:[%s197] ss:$16 sm:$0xc] %vm194, %v193
  %s199 = scalar_lea.vmem %s1, 132
  %200 = vst.msk [vmem:[%s199] ss:$16 sm:$0x30] %vm194, %v193
  %s201 = scalar_lea.vmem %s1, 132
  %202 = vst.msk [vmem:[%s201] ss:$16 sm:$0xc0] %vm194, %v193
  %s203 = scalar_lea.vmem %s0, 16
  %v204 = vld [vmem:[%s203] sm:$0xff]
  %205 = vrot.lane.b32.xlu0 %v204, 124
  %v206 = vpop.permute.xlu0 %205
  %vm207 = vcmask 7168
  %s208 = scalar_lea.vmem %s1, 260
  %209 = vst.msk [vmem:[%s208] ss:$16 sm:$0x3] %vm207, %v206
  %s210 = scalar_lea.vmem %s1, 260
  %211 = vst.msk [vmem:[%s210] ss:$16 sm:$0xc] %vm207, %v206
  %s212 = scalar_lea.vmem %s1, 260
  %213 = vst.msk [vmem:[%s212] ss:$16 sm:$0x30] %vm207, %v206
  %s214 = scalar_lea.vmem %s1, 260
  %215 = vst.msk [vmem:[%s214] ss:$16 sm:$0xc0] %vm207, %v206
  %s216 = scalar_lea.vmem %s0, 24
  %v217 = vld [vmem:[%s216] sm:$0xf]
  %218 = vrot.lane.b32.xlu0 %v217, 124
  %v219 = vpop.permute.xlu0 %218
  %vm220 = vcmask 7168
  %s221 = scalar_lea.vmem %s1, 388
  %222 = vst.msk [vmem:[%s221] ss:$16 sm:$0x3] %vm220, %v219
  %s223 = scalar_lea.vmem %s1, 388
  %224 = vst.msk [vmem:[%s223] ss:$16 sm:$0xc] %vm220, %v219
  %v225 = vld [vmem:[%s0] sm:$0xff]
  %226 = vrot.lane.b32.xlu0 %v225, 123
  %v227 = vpop.permute.xlu0 %226
  %vm228 = vcmask 7168
  %s229 = scalar_lea.vmem %s1, 5
  %230 = vst.msk [vmem:[%s229] ss:$16 sm:$0x3] %vm228, %v227
  %s231 = scalar_lea.vmem %s1, 5
  %232 = vst.msk [vmem:[%s231] ss:$16 sm:$0xc] %vm228, %v227
  %s233 = scalar_lea.vmem %s1, 5
  %234 = vst.msk [vmem:[%s233] ss:$16 sm:$0x30] %vm228, %v227
  %s235 = scalar_lea.vmem %s1, 5
  %236 = vst.msk [vmem:[%s235] ss:$16 sm:$0xc0] %vm228, %v227
  %s237 = scalar_lea.vmem %s0, 8
  %v238 = vld [vmem:[%s237] sm:$0xff]
  %239 = vrot.lane.b32.xlu0 %v238, 123
  %v240 = vpop.permute.xlu0 %239
  %vm241 = vcmask 7168
  %s242 = scalar_lea.vmem %s1, 133
  %243 = vst.msk [vmem:[%s242] ss:$16 sm:$0x3] %vm241, %v240
  %s244 = scalar_lea.vmem %s1, 133
  %245 = vst.msk [vmem:[%s244] ss:$16 sm:$0xc] %vm241, %v240
  %s246 = scalar_lea.vmem %s1, 133
  %247 = vst.msk [vmem:[%s246] ss:$16 sm:$0x30] %vm241, %v240
  %s248 = scalar_lea.vmem %s1, 133
  %249 = vst.msk [vmem:[%s248] ss:$16 sm:$0xc0] %vm241, %v240
  %s250 = scalar_lea.vmem %s0, 16
  %v251 = vld [vmem:[%s250] sm:$0xff]
  %252 = vrot.lane.b32.xlu0 %v251, 123
  %v253 = vpop.permute.xlu0 %252
  %vm254 = vcmask 7168
  %s255 = scalar_lea.vmem %s1, 261
  %256 = vst.msk [vmem:[%s255] ss:$16 sm:$0x3] %vm254, %v253
  %s257 = scalar_lea.vmem %s1, 261
  %258 = vst.msk [vmem:[%s257] ss:$16 sm:$0xc] %vm254, %v253
  %s259 = scalar_lea.vmem %s1, 261
  %260 = vst.msk [vmem:[%s259] ss:$16 sm:$0x30] %vm254, %v253
  %s261 = scalar_lea.vmem %s1, 261
  %262 = vst.msk [vmem:[%s261] ss:$16 sm:$0xc0] %vm254, %v253
  %s263 = scalar_lea.vmem %s0, 24
  %v264 = vld [vmem:[%s263] sm:$0xf]
  %265 = vrot.lane.b32.xlu0 %v264, 123
  %v266 = vpop.permute.xlu0 %265
  %vm267 = vcmask 7168
  %s268 = scalar_lea.vmem %s1, 389
  %269 = vst.msk [vmem:[%s268] ss:$16 sm:$0x3] %vm267, %v266
  %s270 = scalar_lea.vmem %s1, 389
  %271 = vst.msk [vmem:[%s270] ss:$16 sm:$0xc] %vm267, %v266
  %v272 = vld [vmem:[%s0] sm:$0xff]
  %273 = vrot.lane.b32.xlu0 %v272, 122
  %v274 = vpop.permute.xlu0 %273
  %vm275 = vcmask 7168
  %s276 = scalar_lea.vmem %s1, 6
  %277 = vst.msk [vmem:[%s276] ss:$16 sm:$0x3] %vm275, %v274
  %s278 = scalar_lea.vmem %s1, 6
  %279 = vst.msk [vmem:[%s278] ss:$16 sm:$0xc] %vm275, %v274
  %s280 = scalar_lea.vmem %s1, 6
  %281 = vst.msk [vmem:[%s280] ss:$16 sm:$0x30] %vm275, %v274
  %s282 = scalar_lea.vmem %s1, 6
  %283 = vst.msk [vmem:[%s282] ss:$16 sm:$0xc0] %vm275, %v274
  %s284 = scalar_lea.vmem %s0, 8
  %v285 = vld [vmem:[%s284] sm:$0xff]
  %286 = vrot.lane.b32.xlu0 %v285, 122
  %v287 = vpop.permute.xlu0 %286
  %vm288 = vcmask 7168
  %s289 = scalar_lea.vmem %s1, 134
  %290 = vst.msk [vmem:[%s289] ss:$16 sm:$0x3] %vm288, %v287
  %s291 = scalar_lea.vmem %s1, 134
  %292 = vst.msk [vmem:[%s291] ss:$16 sm:$0xc] %vm288, %v287
  %s293 = scalar_lea.vmem %s1, 134
  %294 = vst.msk [vmem:[%s293] ss:$16 sm:$0x30] %vm288, %v287
  %s295 = scalar_lea.vmem %s1, 134
  %296 = vst.msk [vmem:[%s295] ss:$16 sm:$0xc0] %vm288, %v287
  %s297 = scalar_lea.vmem %s0, 16
  %v298 = vld [vmem:[%s297] sm:$0xff]
  %299 = vrot.lane.b32.xlu0 %v298, 122
  %v300 = vpop.permute.xlu0 %299
  %vm301 = vcmask 7168
  %s302 = scalar_lea.vmem %s1, 262
  %303 = vst.msk [vmem:[%s302] ss:$16 sm:$0x3] %vm301, %v300
  %s304 = scalar_lea.vmem %s1, 262
  %305 = vst.msk [vmem:[%s304] ss:$16 sm:$0xc] %vm301, %v300
  %s306 = scalar_lea.vmem %s1, 262
  %307 = vst.msk [vmem:[%s306] ss:$16 sm:$0x30] %vm301, %v300
  %s308 = scalar_lea.vmem %s1, 262
  %309 = vst.msk [vmem:[%s308] ss:$16 sm:$0xc0] %vm301, %v300
  %s310 = scalar_lea.vmem %s0, 24
  %v311 = vld [vmem:[%s310] sm:$0xf]
  %312 = vrot.lane.b32.xlu0 %v311, 122
  %v313 = vpop.permute.xlu0 %312
  %vm314 = vcmask 7168
  %s315 = scalar_lea.vmem %s1, 390
  %316 = vst.msk [vmem:[%s315] ss:$16 sm:$0x3] %vm314, %v313
  %s317 = scalar_lea.vmem %s1, 390
  %318 = vst.msk [vmem:[%s317] ss:$16 sm:$0xc] %vm314, %v313
  %v319 = vld [vmem:[%s0] sm:$0xff]
  %320 = vrot.lane.b32.xlu0 %v319, 121
  %v321 = vpop.permute.xlu0 %320
  %vm322 = vcmask 7168
  %s323 = scalar_lea.vmem %s1, 7
  %324 = vst.msk [vmem:[%s323] ss:$16 sm:$0x3] %vm322, %v321
  %s325 = scalar_lea.vmem %s1, 7
  %326 = vst.msk [vmem:[%s325] ss:$16 sm:$0xc] %vm322, %v321
  %s327 = scalar_lea.vmem %s1, 7
  %328 = vst.msk [vmem:[%s327] ss:$16 sm:$0x30] %vm322, %v321
  %s329 = scalar_lea.vmem %s1, 7
  %330 = vst.msk [vmem:[%s329] ss:$16 sm:$0xc0] %vm322, %v321
  %s331 = scalar_lea.vmem %s0, 8
  %v332 = vld [vmem:[%s331] sm:$0xff]
  %333 = vrot.lane.b32.xlu0 %v332, 121
  %v334 = vpop.permute.xlu0 %333
  %vm335 = vcmask 7168
  %s336 = scalar_lea.vmem %s1, 135
  %337 = vst.msk [vmem:[%s336] ss:$16 sm:$0x3] %vm335, %v334
  %s338 = scalar_lea.vmem %s1, 135
  %339 = vst.msk [vmem:[%s338] ss:$16 sm:$0xc] %vm335, %v334
  %s340 = scalar_lea.vmem %s1, 135
  %341 = vst.msk [vmem:[%s340] ss:$16 sm:$0x30] %vm335, %v334
  %s342 = scalar_lea.vmem %s1, 135
  %343 = vst.msk [vmem:[%s342] ss:$16 sm:$0xc0] %vm335, %v334
  %s344 = scalar_lea.vmem %s0, 16
  %v345 = vld [vmem:[%s344] sm:$0xff]
  %346 = vrot.lane.b32.xlu0 %v345, 121
  %v347 = vpop.permute.xlu0 %346
  %vm348 = vcmask 7168
  %s349 = scalar_lea.vmem %s1, 263
  %350 = vst.msk [vmem:[%s349] ss:$16 sm:$0x3] %vm348, %v347
  %s351 = scalar_lea.vmem %s1, 263
  %352 = vst.msk [vmem:[%s351] ss:$16 sm:$0xc] %vm348, %v347
  %s353 = scalar_lea.vmem %s1, 263
  %354 = vst.msk [vmem:[%s353] ss:$16 sm:$0x30] %vm348, %v347
  %s355 = scalar_lea.vmem %s1, 263
  %356 = vst.msk [vmem:[%s355] ss:$16 sm:$0xc0] %vm348, %v347
  %s357 = scalar_lea.vmem %s0, 24
  %v358 = vld [vmem:[%s357] sm:$0xf]
  %359 = vrot.lane.b32.xlu0 %v358, 121
  %v360 = vpop.permute.xlu0 %359
  %vm361 = vcmask 7168
  %s362 = scalar_lea.vmem %s1, 391
  %363 = vst.msk [vmem:[%s362] ss:$16 sm:$0x3] %vm361, %v360
  %s364 = scalar_lea.vmem %s1, 391
  %365 = vst.msk [vmem:[%s364] ss:$16 sm:$0xc] %vm361, %v360
  %v366 = vld [vmem:[%s0] sm:$0xff]
  %367 = vrot.lane.b32.xlu0 %v366, 120
  %v368 = vpop.permute.xlu0 %367
  %vm369 = vcmask 7168
  %s370 = scalar_lea.vmem %s1, 8
  %371 = vst.msk [vmem:[%s370] ss:$16 sm:$0x3] %vm369, %v368
  %s372 = scalar_lea.vmem %s1, 8
  %373 = vst.msk [vmem:[%s372] ss:$16 sm:$0xc] %vm369, %v368
  %s374 = scalar_lea.vmem %s1, 8
  %375 = vst.msk [vmem:[%s374] ss:$16 sm:$0x30] %vm369, %v368
  %s376 = scalar_lea.vmem %s1, 8
  %377 = vst.msk [vmem:[%s376] ss:$16 sm:$0xc0] %vm369, %v368
  %s378 = scalar_lea.vmem %s0, 8
  %v379 = vld [vmem:[%s378] sm:$0xff]
  %380 = vrot.lane.b32.xlu0 %v379, 120
  %v381 = vpop.permute.xlu0 %380
  %vm382 = vcmask 7168
  %s383 = scalar_lea.vmem %s1, 136
  %384 = vst.msk [vmem:[%s383] ss:$16 sm:$0x3] %vm382, %v381
  %s385 = scalar_lea.vmem %s1, 136
  %386 = vst.msk [vmem:[%s385] ss:$16 sm:$0xc] %vm382, %v381
  %s387 = scalar_lea.vmem %s1, 136
  %388 = vst.msk [vmem:[%s387] ss:$16 sm:$0x30] %vm382, %v381
  %s389 = scalar_lea.vmem %s1, 136
  %390 = vst.msk [vmem:[%s389] ss:$16 sm:$0xc0] %vm382, %v381
  %s391 = scalar_lea.vmem %s0, 16
  %v392 = vld [vmem:[%s391] sm:$0xff]
  %393 = vrot.lane.b32.xlu0 %v392, 120
  %v394 = vpop.permute.xlu0 %393
  %vm395 = vcmask 7168
  %s396 = scalar_lea.vmem %s1, 264
  %397 = vst.msk [vmem:[%s396] ss:$16 sm:$0x3] %vm395, %v394
  %s398 = scalar_lea.vmem %s1, 264
  %399 = vst.msk [vmem:[%s398] ss:$16 sm:$0xc] %vm395, %v394
  %s400 = scalar_lea.vmem %s1, 264
  %401 = vst.msk [vmem:[%s400] ss:$16 sm:$0x30] %vm395, %v394
  %s402 = scalar_lea.vmem %s1, 264
  %403 = vst.msk [vmem:[%s402] ss:$16 sm:$0xc0] %vm395, %v394
  %s404 = scalar_lea.vmem %s0, 24
  %v405 = vld [vmem:[%s404] sm:$0xf]
  %406 = vrot.lane.b32.xlu0 %v405, 120
  %v407 = vpop.permute.xlu0 %406
  %vm408 = vcmask 7168
  %s409 = scalar_lea.vmem %s1, 392
  %410 = vst.msk [vmem:[%s409] ss:$16 sm:$0x3] %vm408, %v407
  %s411 = scalar_lea.vmem %s1, 392
  %412 = vst.msk [vmem:[%s411] ss:$16 sm:$0xc] %vm408, %v407
  %v413 = vld [vmem:[%s0] sm:$0xff]
  %414 = vrot.lane.b32.xlu0 %v413, 119
  %v415 = vpop.permute.xlu0 %414
  %vm416 = vcmask 7168
  %s417 = scalar_lea.vmem %s1, 9
  %418 = vst.msk [vmem:[%s417] ss:$16 sm:$0x3] %vm416, %v415
  %s419 = scalar_lea.vmem %s1, 9
  %420 = vst.msk [vmem:[%s419] ss:$16 sm:$0xc] %vm416, %v415
  %s421 = scalar_lea.vmem %s1, 9
  %422 = vst.msk [vmem:[%s421] ss:$16 sm:$0x30] %vm416, %v415
  %s423 = scalar_lea.vmem %s1, 9
  %424 = vst.msk [vmem:[%s423] ss:$16 sm:$0xc0] %vm416, %v415
  %s425 = scalar_lea.vmem %s0, 8
  %v426 = vld [vmem:[%s425] sm:$0xff]
  %427 = vrot.lane.b32.xlu0 %v426, 119
  %v428 = vpop.permute.xlu0 %427
  %vm429 = vcmask 7168
  %s430 = scalar_lea.vmem %s1, 137
  %431 = vst.msk [vmem:[%s430] ss:$16 sm:$0x3] %vm429, %v428
  %s432 = scalar_lea.vmem %s1, 137
  %433 = vst.msk [vmem:[%s432] ss:$16 sm:$0xc] %vm429, %v428
  %s434 = scalar_lea.vmem %s1, 137
  %435 = vst.msk [vmem:[%s434] ss:$16 sm:$0x30] %vm429, %v428
  %s436 = scalar_lea.vmem %s1, 137
  %437 = vst.msk [vmem:[%s436] ss:$16 sm:$0xc0] %vm429, %v428
  %s438 = scalar_lea.vmem %s0, 16
  %v439 = vld [vmem:[%s438] sm:$0xff]
  %440 = vrot.lane.b32.xlu0 %v439, 119
  %v441 = vpop.permute.xlu0 %440
  %vm442 = vcmask 7168
  %s443 = scalar_lea.vmem %s1, 265
  %444 = vst.msk [vmem:[%s443] ss:$16 sm:$0x3] %vm442, %v441
  %s445 = scalar_lea.vmem %s1, 265
  %446 = vst.msk [vmem:[%s445] ss:$16 sm:$0xc] %vm442, %v441
  %s447 = scalar_lea.vmem %s1, 265
  %448 = vst.msk [vmem:[%s447] ss:$16 sm:$0x30] %vm442, %v441
  %s449 = scalar_lea.vmem %s1, 265
  %450 = vst.msk [vmem:[%s449] ss:$16 sm:$0xc0] %vm442, %v441
  %s451 = scalar_lea.vmem %s0, 24
  %v452 = vld [vmem:[%s451] sm:$0xf]
  %453 = vrot.lane.b32.xlu0 %v452, 119
  %v454 = vpop.permute.xlu0 %453
  %vm455 = vcmask 7168
  %s456 = scalar_lea.vmem %s1, 393
  %457 = vst.msk [vmem:[%s456] ss:$16 sm:$0x3] %vm455, %v454
  %s458 = scalar_lea.vmem %s1, 393
  %459 = vst.msk [vmem:[%s458] ss:$16 sm:$0xc] %vm455, %v454
  %v460 = vld [vmem:[%s0] sm:$0xff]
  %461 = vrot.lane.b32.xlu0 %v460, 118
  %v462 = vpop.permute.xlu0 %461
  %vm463 = vcmask 7168
  %s464 = scalar_lea.vmem %s1, 10
  %465 = vst.msk [vmem:[%s464] ss:$16 sm:$0x3] %vm463, %v462
  %s466 = scalar_lea.vmem %s1, 10
  %467 = vst.msk [vmem:[%s466] ss:$16 sm:$0xc] %vm463, %v462
  %s468 = scalar_lea.vmem %s1, 10
  %469 = vst.msk [vmem:[%s468] ss:$16 sm:$0x30] %vm463, %v462
  %s470 = scalar_lea.vmem %s1, 10
  %471 = vst.msk [vmem:[%s470] ss:$16 sm:$0xc0] %vm463, %v462
  %s472 = scalar_lea.vmem %s0, 8
  %v473 = vld [vmem:[%s472] sm:$0xff]
  %474 = vrot.lane.b32.xlu0 %v473, 118
  %v475 = vpop.permute.xlu0 %474
  %vm476 = vcmask 7168
  %s477 = scalar_lea.vmem %s1, 138
  %478 = vst.msk [vmem:[%s477] ss:$16 sm:$0x3] %vm476, %v475
  %s479 = scalar_lea.vmem %s1, 138
  %480 = vst.msk [vmem:[%s479] ss:$16 sm:$0xc] %vm476, %v475
  %s481 = scalar_lea.vmem %s1, 138
  %482 = vst.msk [vmem:[%s481] ss:$16 sm:$0x30] %vm476, %v475
  %s483 = scalar_lea.vmem %s1, 138
  %484 = vst.msk [vmem:[%s483] ss:$16 sm:$0xc0] %vm476, %v475
  %s485 = scalar_lea.vmem %s0, 16
  %v486 = vld [vmem:[%s485] sm:$0xff]
  %487 = vrot.lane.b32.xlu0 %v486, 118
  %v488 = vpop.permute.xlu0 %487
  %vm489 = vcmask 7168
  %s490 = scalar_lea.vmem %s1, 266
  %491 = vst.msk [vmem:[%s490] ss:$16 sm:$0x3] %vm489, %v488
  %s492 = scalar_lea.vmem %s1, 266
  %493 = vst.msk [vmem:[%s492] ss:$16 sm:$0xc] %vm489, %v488
  %s494 = scalar_lea.vmem %s1, 266
  %495 = vst.msk [vmem:[%s494] ss:$16 sm:$0x30] %vm489, %v488
  %s496 = scalar_lea.vmem %s1, 266
  %497 = vst.msk [vmem:[%s496] ss:$16 sm:$0xc0] %vm489, %v488
  %s498 = scalar_lea.vmem %s0, 24
  %v499 = vld [vmem:[%s498] sm:$0xf]
  %500 = vrot.lane.b32.xlu0 %v499, 118
  %v501 = vpop.permute.xlu0 %500
  %vm502 = vcmask 7168
  %s503 = scalar_lea.vmem %s1, 394
  %504 = vst.msk [vmem:[%s503] ss:$16 sm:$0x3] %vm502, %v501
  %s505 = scalar_lea.vmem %s1, 394
  %506 = vst.msk [vmem:[%s505] ss:$16 sm:$0xc] %vm502, %v501
  %v507 = vld [vmem:[%s0] sm:$0xff]
  %508 = vrot.lane.b32.xlu0 %v507, 117
  %v509 = vpop.permute.xlu0 %508
  %vm510 = vcmask 7168
  %s511 = scalar_lea.vmem %s1, 11
  %512 = vst.msk [vmem:[%s511] ss:$16 sm:$0x3] %vm510, %v509
  %s513 = scalar_lea.vmem %s1, 11
  %514 = vst.msk [vmem:[%s513] ss:$16 sm:$0xc] %vm510, %v509
  %s515 = scalar_lea.vmem %s1, 11
  %516 = vst.msk [vmem:[%s515] ss:$16 sm:$0x30] %vm510, %v509
  %s517 = scalar_lea.vmem %s1, 11
  %518 = vst.msk [vmem:[%s517] ss:$16 sm:$0xc0] %vm510, %v509
  %s519 = scalar_lea.vmem %s0, 8
  %v520 = vld [vmem:[%s519] sm:$0xff]
  %521 = vrot.lane.b32.xlu0 %v520, 117
  %v522 = vpop.permute.xlu0 %521
  %vm523 = vcmask 7168
  %s524 = scalar_lea.vmem %s1, 139
  %525 = vst.msk [vmem:[%s524] ss:$16 sm:$0x3] %vm523, %v522
  %s526 = scalar_lea.vmem %s1, 139
  %527 = vst.msk [vmem:[%s526] ss:$16 sm:$0xc] %vm523, %v522
  %s528 = scalar_lea.vmem %s1, 139
  %529 = vst.msk [vmem:[%s528] ss:$16 sm:$0x30] %vm523, %v522
  %s530 = scalar_lea.vmem %s1, 139
  %531 = vst.msk [vmem:[%s530] ss:$16 sm:$0xc0] %vm523, %v522
  %s532 = scalar_lea.vmem %s0, 16
  %v533 = vld [vmem:[%s532] sm:$0xff]
  %534 = vrot.lane.b32.xlu0 %v533, 117
  %v535 = vpop.permute.xlu0 %534
  %vm536 = vcmask 7168
  %s537 = scalar_lea.vmem %s1, 267
  %538 = vst.msk [vmem:[%s537] ss:$16 sm:$0x3] %vm536, %v535
  %s539 = scalar_lea.vmem %s1, 267
  %540 = vst.msk [vmem:[%s539] ss:$16 sm:$0xc] %vm536, %v535
  %s541 = scalar_lea.vmem %s1, 267
  %542 = vst.msk [vmem:[%s541] ss:$16 sm:$0x30] %vm536, %v535
  %s543 = scalar_lea.vmem %s1, 267
  %544 = vst.msk [vmem:[%s543] ss:$16 sm:$0xc0] %vm536, %v535
  %s545 = scalar_lea.vmem %s0, 24
  %v546 = vld [vmem:[%s545] sm:$0xf]
  %547 = vrot.lane.b32.xlu0 %v546, 117
  %v548 = vpop.permute.xlu0 %547
  %vm549 = vcmask 7168
  %s550 = scalar_lea.vmem %s1, 395
  %551 = vst.msk [vmem:[%s550] ss:$16 sm:$0x3] %vm549, %v548
  %s552 = scalar_lea.vmem %s1, 395
  %553 = vst.msk [vmem:[%s552] ss:$16 sm:$0xc] %vm549, %v548
  %v554 = vld [vmem:[%s0] sm:$0xff]
  %555 = vrot.lane.b32.xlu0 %v554, 116
  %v556 = vpop.permute.xlu0 %555
  %vm557 = vcmask 7168
  %s558 = scalar_lea.vmem %s1, 12
  %559 = vst.msk [vmem:[%s558] ss:$16 sm:$0x3] %vm557, %v556
  %s560 = scalar_lea.vmem %s1, 12
  %561 = vst.msk [vmem:[%s560] ss:$16 sm:$0xc] %vm557, %v556
  %s562 = scalar_lea.vmem %s1, 12
  %563 = vst.msk [vmem:[%s562] ss:$16 sm:$0x30] %vm557, %v556
  %s564 = scalar_lea.vmem %s1, 12
  %565 = vst.msk [vmem:[%s564] ss:$16 sm:$0xc0] %vm557, %v556
  %s566 = scalar_lea.vmem %s0, 8
  %v567 = vld [vmem:[%s566] sm:$0xff]
  %568 = vrot.lane.b32.xlu0 %v567, 116
  %v569 = vpop.permute.xlu0 %568
  %vm570 = vcmask 7168
  %s571 = scalar_lea.vmem %s1, 140
  %572 = vst.msk [vmem:[%s571] ss:$16 sm:$0x3] %vm570, %v569
  %s573 = scalar_lea.vmem %s1, 140
  %574 = vst.msk [vmem:[%s573] ss:$16 sm:$0xc] %vm570, %v569
  %s575 = scalar_lea.vmem %s1, 140
  %576 = vst.msk [vmem:[%s575] ss:$16 sm:$0x30] %vm570, %v569
  %s577 = scalar_lea.vmem %s1, 140
  %578 = vst.msk [vmem:[%s577] ss:$16 sm:$0xc0] %vm570, %v569
  %s579 = scalar_lea.vmem %s0, 16
  %v580 = vld [vmem:[%s579] sm:$0xff]
  %581 = vrot.lane.b32.xlu0 %v580, 116
  %v582 = vpop.permute.xlu0 %581
  %vm583 = vcmask 7168
  %s584 = scalar_lea.vmem %s1, 268
  %585 = vst.msk [vmem:[%s584] ss:$16 sm:$0x3] %vm583, %v582
  %s586 = scalar_lea.vmem %s1, 268
  %587 = vst.msk [vmem:[%s586] ss:$16 sm:$0xc] %vm583, %v582
  %s588 = scalar_lea.vmem %s1, 268
  %589 = vst.msk [vmem:[%s588] ss:$16 sm:$0x30] %vm583, %v582
  %s590 = scalar_lea.vmem %s1, 268
  %591 = vst.msk [vmem:[%s590] ss:$16 sm:$0xc0] %vm583, %v582
  %s592 = scalar_lea.vmem %s0, 24
  %v593 = vld [vmem:[%s592] sm:$0xf]
  %594 = vrot.lane.b32.xlu0 %v593, 116
  %v595 = vpop.permute.xlu0 %594
  %vm596 = vcmask 7168
  %s597 = scalar_lea.vmem %s1, 396
  %598 = vst.msk [vmem:[%s597] ss:$16 sm:$0x3] %vm596, %v595
  %s599 = scalar_lea.vmem %s1, 396
  %600 = vst.msk [vmem:[%s599] ss:$16 sm:$0xc] %vm596, %v595
  %v601 = vld [vmem:[%s0] sm:$0xff]
  %602 = vrot.lane.b32.xlu0 %v601, 115
  %v603 = vpop.permute.xlu0 %602
  %vm604 = vcmask 7168
  %s605 = scalar_lea.vmem %s1, 13
  %606 = vst.msk [vmem:[%s605] ss:$16 sm:$0x3] %vm604, %v603
  %s607 = scalar_lea.vmem %s1, 13
  %608 = vst.msk [vmem:[%s607] ss:$16 sm:$0xc] %vm604, %v603
  %s609 = scalar_lea.vmem %s1, 13
  %610 = vst.msk [vmem:[%s609] ss:$16 sm:$0x30] %vm604, %v603
  %s611 = scalar_lea.vmem %s1, 13
  %612 = vst.msk [vmem:[%s611] ss:$16 sm:$0xc0] %vm604, %v603
  %s613 = scalar_lea.vmem %s0, 8
  %v614 = vld [vmem:[%s613] sm:$0xff]
  %615 = vrot.lane.b32.xlu0 %v614, 115
  %v616 = vpop.permute.xlu0 %615
  %vm617 = vcmask 7168
  %s618 = scalar_lea.vmem %s1, 141
  %619 = vst.msk [vmem:[%s618] ss:$16 sm:$0x3] %vm617, %v616
  %s620 = scalar_lea.vmem %s1, 141
  %621 = vst.msk [vmem:[%s620] ss:$16 sm:$0xc] %vm617, %v616
  %s622 = scalar_lea.vmem %s1, 141
  %623 = vst.msk [vmem:[%s622] ss:$16 sm:$0x30] %vm617, %v616
  %s624 = scalar_lea.vmem %s1, 141
  %625 = vst.msk [vmem:[%s624] ss:$16 sm:$0xc0] %vm617, %v616
  %s626 = scalar_lea.vmem %s0, 16
  %v627 = vld [vmem:[%s626] sm:$0xff]
  %628 = vrot.lane.b32.xlu0 %v627, 115
  %v629 = vpop.permute.xlu0 %628
  %vm630 = vcmask 7168
  %s631 = scalar_lea.vmem %s1, 269
  %632 = vst.msk [vmem:[%s631] ss:$16 sm:$0x3] %vm630, %v629
  %s633 = scalar_lea.vmem %s1, 269
  %634 = vst.msk [vmem:[%s633] ss:$16 sm:$0xc] %vm630, %v629
  %s635 = scalar_lea.vmem %s1, 269
  %636 = vst.msk [vmem:[%s635] ss:$16 sm:$0x30] %vm630, %v629
  %s637 = scalar_lea.vmem %s1, 269
  %638 = vst.msk [vmem:[%s637] ss:$16 sm:$0xc0] %vm630, %v629
  %s639 = scalar_lea.vmem %s0, 24
  %v640 = vld [vmem:[%s639] sm:$0xf]
  %641 = vrot.lane.b32.xlu0 %v640, 115
  %v642 = vpop.permute.xlu0 %641
  %vm643 = vcmask 7168
  %s644 = scalar_lea.vmem %s1, 397
  %645 = vst.msk [vmem:[%s644] ss:$16 sm:$0x3] %vm643, %v642
  %s646 = scalar_lea.vmem %s1, 397
  %647 = vst.msk [vmem:[%s646] ss:$16 sm:$0xc] %vm643, %v642
  %v648 = vld [vmem:[%s0] sm:$0xff]
  %649 = vrot.lane.b32.xlu0 %v648, 114
  %v650 = vpop.permute.xlu0 %649
  %vm651 = vcmask 7168
  %s652 = scalar_lea.vmem %s1, 14
  %653 = vst.msk [vmem:[%s652] ss:$16 sm:$0x3] %vm651, %v650
  %s654 = scalar_lea.vmem %s1, 14
  %655 = vst.msk [vmem:[%s654] ss:$16 sm:$0xc] %vm651, %v650
  %s656 = scalar_lea.vmem %s1, 14
  %657 = vst.msk [vmem:[%s656] ss:$16 sm:$0x30] %vm651, %v650
  %s658 = scalar_lea.vmem %s1, 14
  %659 = vst.msk [vmem:[%s658] ss:$16 sm:$0xc0] %vm651, %v650
  %s660 = scalar_lea.vmem %s0, 8
  %v661 = vld [vmem:[%s660] sm:$0xff]
  %662 = vrot.lane.b32.xlu0 %v661, 114
  %v663 = vpop.permute.xlu0 %662
  %vm664 = vcmask 7168
  %s665 = scalar_lea.vmem %s1, 142
  %666 = vst.msk [vmem:[%s665] ss:$16 sm:$0x3] %vm664, %v663
  %s667 = scalar_lea.vmem %s1, 142
  %668 = vst.msk [vmem:[%s667] ss:$16 sm:$0xc] %vm664, %v663
  %s669 = scalar_lea.vmem %s1, 142
  %670 = vst.msk [vmem:[%s669] ss:$16 sm:$0x30] %vm664, %v663
  %s671 = scalar_lea.vmem %s1, 142
  %672 = vst.msk [vmem:[%s671] ss:$16 sm:$0xc0] %vm664, %v663
  %s673 = scalar_lea.vmem %s0, 16
  %v674 = vld [vmem:[%s673] sm:$0xff]
  %675 = vrot.lane.b32.xlu0 %v674, 114
  %v676 = vpop.permute.xlu0 %675
  %vm677 = vcmask 7168
  %s678 = scalar_lea.vmem %s1, 270
  %679 = vst.msk [vmem:[%s678] ss:$16 sm:$0x3] %vm677, %v676
  %s680 = scalar_lea.vmem %s1, 270
  %681 = vst.msk [vmem:[%s680] ss:$16 sm:$0xc] %vm677, %v676
  %s682 = scalar_lea.vmem %s1, 270
  %683 = vst.msk [vmem:[%s682] ss:$16 sm:$0x30] %vm677, %v676
  %s684 = scalar_lea.vmem %s1, 270
  %685 = vst.msk [vmem:[%s684] ss:$16 sm:$0xc0] %vm677, %v676
  %s686 = scalar_lea.vmem %s0, 24
  %v687 = vld [vmem:[%s686] sm:$0xf]
  %688 = vrot.lane.b32.xlu0 %v687, 114
  %v689 = vpop.permute.xlu0 %688
  %vm690 = vcmask 7168
  %s691 = scalar_lea.vmem %s1, 398
  %692 = vst.msk [vmem:[%s691] ss:$16 sm:$0x3] %vm690, %v689
  %s693 = scalar_lea.vmem %s1, 398
  %694 = vst.msk [vmem:[%s693] ss:$16 sm:$0xc] %vm690, %v689
  %v695 = vld [vmem:[%s0] sm:$0xff]
  %696 = vrot.lane.b32.xlu0 %v695, 113
  %v697 = vpop.permute.xlu0 %696
  %vm698 = vcmask 7168
  %s699 = scalar_lea.vmem %s1, 15
  %700 = vst.msk [vmem:[%s699] ss:$16 sm:$0x3] %vm698, %v697
  %s701 = scalar_lea.vmem %s1, 15
  %702 = vst.msk [vmem:[%s701] ss:$16 sm:$0xc] %vm698, %v697
  %s703 = scalar_lea.vmem %s1, 15
  %704 = vst.msk [vmem:[%s703] ss:$16 sm:$0x30] %vm698, %v697
  %s705 = scalar_lea.vmem %s1, 15
  %706 = vst.msk [vmem:[%s705] ss:$16 sm:$0xc0] %vm698, %v697
  %s707 = scalar_lea.vmem %s0, 8
  %v708 = vld [vmem:[%s707] sm:$0xff]
  %709 = vrot.lane.b32.xlu0 %v708, 113
  %v710 = vpop.permute.xlu0 %709
  %vm711 = vcmask 7168
  %s712 = scalar_lea.vmem %s1, 143
  %713 = vst.msk [vmem:[%s712] ss:$16 sm:$0x3] %vm711, %v710
  %s714 = scalar_lea.vmem %s1, 143
  %715 = vst.msk [vmem:[%s714] ss:$16 sm:$0xc] %vm711, %v710
  %s716 = scalar_lea.vmem %s1, 143
  %717 = vst.msk [vmem:[%s716] ss:$16 sm:$0x30] %vm711, %v710
  %s718 = scalar_lea.vmem %s1, 143
  %719 = vst.msk [vmem:[%s718] ss:$16 sm:$0xc0] %vm711, %v710
  %s720 = scalar_lea.vmem %s0, 16
  %v721 = vld [vmem:[%s720] sm:$0xff]
  %722 = vrot.lane.b32.xlu0 %v721, 113
  %v723 = vpop.permute.xlu0 %722
  %vm724 = vcmask 7168
  %s725 = scalar_lea.vmem %s1, 271
  %726 = vst.msk [vmem:[%s725] ss:$16 sm:$0x3] %vm724, %v723
  %s727 = scalar_lea.vmem %s1, 271
  %728 = vst.msk [vmem:[%s727] ss:$16 sm:$0xc] %vm724, %v723
  %s729 = scalar_lea.vmem %s1, 271
  %730 = vst.msk [vmem:[%s729] ss:$16 sm:$0x30] %vm724, %v723
  %s731 = scalar_lea.vmem %s1, 271
  %732 = vst.msk [vmem:[%s731] ss:$16 sm:$0xc0] %vm724, %v723
  %s733 = scalar_lea.vmem %s0, 24
  %v734 = vld [vmem:[%s733] sm:$0xf]
  %735 = vrot.lane.b32.xlu0 %v734, 113
  %v736 = vpop.permute.xlu0 %735
  %vm737 = vcmask 7168
  %s738 = scalar_lea.vmem %s1, 399
  %739 = vst.msk [vmem:[%s738] ss:$16 sm:$0x3] %vm737, %v736
  %s740 = scalar_lea.vmem %s1, 399
  %741 = vst.msk [vmem:[%s740] ss:$16 sm:$0xc] %vm737, %v736

// kernel: cnn1_forward.1
$region0: #{cnn1_forward.1}
  #allocation0 [shape = 'u32[]', space=smem, size = 0x4, offset = 0x4, fixed_abs, tag = 'smem constant byte address 0x4 - core index']
  #allocation1 [shape = 'u32[72,128]{1,0:T(1,128)}', space=vmem, size = 0x9000, scoped, tag = 'internal scratch']
  %s0 = inlined_call_operand.vmem [shape: f32[128,30], index: 0, kind: input, shape index: {}]
  %s1 = inlined_call_operand.vmem [shape: bf16[448,30], index: 1, kind: input, shape index: {}]
  %s2 = inlined_call_operand.vmem [shape: f32[448,1], index: 2, kind: input, shape index: {}]
  %s3 = inlined_call_operand.vmem [shape: bf16[384,224], index: 3, kind: input, shape index: {}]
  %s4 = inlined_call_operand.vmem [shape: f32[32,1], index: 4, kind: input, shape index: {}]
  %s5 = inlined_call_operand.vmem [shape: bf16[192,192], index: 5, kind: input, shape index: {}]
  %s6 = inlined_call_operand.vmem [shape: f32[192,1], index: 6, kind: input, shape index: {}]
  %s7 = inlined_call_operand.vmem [shape: bf16[4,192], index: 7, kind: input, shape index: {}]
  %s8 = inlined_call_operand.vmem [shape: f32[1,4], index: 8, kind: input, shape index: {}]
  %s9 = inlined_call_operand.vmem [shape: f32[128,192], index: 9, kind: output, shape index: {0}]
  %s10 = inlined_call_operand.vmem [shape: f32[128,4], index: 10, kind: output, shape index: {1}]
  %11 = xla_tuple %s9, %s10
  %s12 = sld [smem:[#allocation0]]
  $region54: #{cnn1_forward.1} parent=0
    _
  %s14 = ssub.s32 1, %s12
  %s15 = scalar_select 0, %s14, %s12
  // Predicated region
  $region2: #{cnn1_forward.1} parent=0 // pred_check
    _
  $region3: #{cnn1_forward.1} parent=0 // pred_check_branch
    %17 = sbr.rel (0) target = $region5
  $region4: #{cnn1_forward.1} parent=0 // pred_region
    _
  $region5: #{cnn1_forward.1} parent=0 // pred_fallthru
    _
  // Predicated region
  $region6: #{cnn1_forward.1} parent=0 // pred_check
    _
  $region7: #{cnn1_forward.1} parent=0 // pred_check_branch
    %19 = sbr.rel (0) target = $region9
  $region8: #{cnn1_forward.1} parent=0 // pred_region
    _
  $region9: #{cnn1_forward.1} parent=0 // pred_fallthru
    _
  // Predicated region
  $region10: #{cnn1_forward.1} parent=0 // pred_check
    _
  $region11: #{cnn1_forward.1} parent=0 // pred_check_branch
    %21 = sbr.rel (0) target = $region13
  $region12: #{cnn1_forward.1} parent=0 // pred_region
    _
  $region13: #{cnn1_forward.1} parent=0 // pred_fallthru
    _
  // Predicated region
  $region14: #{cnn1_forward.1} parent=0 // pred_check
    _
  $region15: #{cnn1_forward.1} parent=0 // pred_check_branch
    %23 = sbr.rel (0) target = $region17
  $region16: #{cnn1_forward.1} parent=0 // pred_region
    _
  $region17: #{cnn1_forward.1} parent=0 // pred_fallthru
    _
  // Predicated region
  $region18: #{cnn1_forward.1} parent=0 // pred_check
    _
  $region19: #{cnn1_forward.1} parent=0 // pred_check_branch
    %25 = sbr.rel (0) target = $region21
  $region20: #{cnn1_forward.1} parent=0 // pred_region
    _
  $region21: #{cnn1_forward.1} parent=0 // pred_fallthru
    _
  // Predicated region
  $region22: #{cnn1_forward.1} parent=0 // pred_check
    _
  $region23: #{cnn1_forward.1} parent=0 // pred_check_branch
    %27 = sbr.rel (0) target = $region25
  $region24: #{cnn1_forward.1} parent=0 // pred_region
    _
  $region25: #{cnn1_forward.1} parent=0 // pred_fallthru
    _
  // Predicated region
  $region26: #{cnn1_forward.1} parent=0 // pred_check
    _
  $region27: #{cnn1_forward.1} parent=0 // pred_check_branch
    %29 = sbr.rel (0) target = $region29
  $region28: #{cnn1_forward.1} parent=0 // pred_region
    _
  $region29: #{cnn1_forward.1} parent=0 // pred_fallthru
    _
  // Predicated region
  $region30: #{cnn1_forward.1} parent=0 // pred_check
    _
  $region31: #{cnn1_forward.1} parent=0 // pred_check_branch
    %31 = sbr.rel (0) target = $region33
  $region32: #{cnn1_forward.1} parent=0 // pred_region
    _
  $region33: #{cnn1_forward.1} parent=0 // pred_fallthru
    _
  // Predicated region
  $region34: #{cnn1_forward.1} parent=0 // pred_check
    _
  $region35: #{cnn1_forward.1} parent=0 // pred_check_branch
    %33 = sbr.rel (0) target = $region37
  $region36: #{cnn1_forward.1} parent=0 // pred_region
    _
  $region37: #{cnn1_forward.1} parent=0 // pred_fallthru
    _
  %v35 = vld [vmem:[%s0] sm:$0xff]
  %v36 = vld [vmem:[%s0 + $0x8] sm:$0xff]
  %v37 = vld [vmem:[%s0 + $0x10] sm:$0xff]
  %v38 = vld [vmem:[%s0 + $0x18] sm:$0xff]
  %v39 = vld [vmem:[%s0 + $0x20] sm:$0xff]
  %v40 = vld [vmem:[%s0 + $0x28] sm:$0xff]
  %v41 = vld [vmem:[%s0 + $0x30] sm:$0xff]
  %v42 = vld [vmem:[%s0 + $0x38] sm:$0xff]
  %v43 = vld [vmem:[%s0 + $0x40] sm:$0xff]
  %v44 = vld [vmem:[%s0 + $0x48] sm:$0xff]
  %v45 = vld [vmem:[%s0 + $0x50] sm:$0xff]
  %v46 = vld [vmem:[%s0 + $0x58] sm:$0xff]
  %v47 = vld [vmem:[%s0 + $0x60] sm:$0xff]
  %v48 = vld [vmem:[%s0 + $0x68] sm:$0xff]
  %v49 = vld [vmem:[%s0 + $0x70] sm:$0xff]
  %v50 = vld [vmem:[%s0 + $0x78] sm:$0xff]
  %v51 = vpack.c.bf16 %v36, %v35
  %v52 = vpack.c.bf16 %v38, %v37
  %v53 = vpack.c.bf16 %v40, %v39
  %v54 = vpack.c.bf16 %v42, %v41
  %v55 = vpack.c.bf16 %v44, %v43
  %v56 = vpack.c.bf16 %v46, %v45
  %v57 = vpack.c.bf16 %v48, %v47
  %v58 = vpack.c.bf16 %v50, %v49
  %v59 = vld [vmem:[%s1] sm:$0xf]
  %v60 = vld [vmem:[%s1 + $0x4] sm:$0xf]
  %v61 = vld [vmem:[%s1 + $0x8] sm:$0xf]
  %v62 = vld [vmem:[%s1 + $0xc] sm:$0xf]
  %v63 = vld [vmem:[%s1 + $0x10] sm:$0xf]
  %v64 = vld [vmem:[%s1 + $0x14] sm:$0xf]
  %v65 = vld [vmem:[%s1 + $0x18] sm:$0xf]
  %v66 = vld [vmem:[%s1 + $0x1c] sm:$0xf]
  %v67 = vld [vmem:[%s1 + $0x20] sm:$0xf]
  %v68 = vld [vmem:[%s1 + $0x24] sm:$0xf]
  %v69 = vld [vmem:[%s1 + $0x28] sm:$0xf]
  %v70 = vld [vmem:[%s1 + $0x2c] sm:$0xf]
  %v71 = vld [vmem:[%s1 + $0x30] sm:$0xf]
  %v72 = vld [vmem:[%s1 + $0x34] sm:$0xf]
  %v73 = vld [vmem:[%s1 + $0x38] sm:$0xf]
  %v74 = vld [vmem:[%s1 + $0x3c] sm:$0xf]
  %v75 = vld [vmem:[%s1 + $0x40] sm:$0xf]
  %v76 = vld [vmem:[%s1 + $0x44] sm:$0xf]
  %v77 = vld [vmem:[%s1 + $0x48] sm:$0xf]
  %v78 = vld [vmem:[%s1 + $0x4c] sm:$0xf]
  %v79 = vld [vmem:[%s1 + $0x50] sm:$0xf]
  %v80 = vld [vmem:[%s1 + $0x54] sm:$0xf]
  %v81 = vld [vmem:[%s1 + $0x58] sm:$0xf]
  %v82 = vld [vmem:[%s1 + $0x5c] sm:$0xf]
  %v83 = vld [vmem:[%s1 + $0x60] sm:$0xf]
  %v84 = vld [vmem:[%s1 + $0x64] sm:$0xf]
  %v85 = vld [vmem:[%s1 + $0x68] sm:$0xf]
  %v86 = vld [vmem:[%s1 + $0x6c] sm:$0xf]
  %v87 = vld [vmem:[%s1 + $0x70] sm:$0xf]
  %v88 = vld [vmem:[%s1 + $0x74] sm:$0xf]
  %v89 = vld [vmem:[%s1 + $0x78] sm:$0xf]
  %v90 = vld [vmem:[%s1 + $0x7c] sm:$0xf]
  %v91 = vld [vmem:[%s1 + $0x80] sm:$0xf]
  %v92 = vld [vmem:[%s1 + $0x84] sm:$0xf]
  %v93 = vld [vmem:[%s1 + $0x88] sm:$0xf]
  %v94 = vld [vmem:[%s1 + $0x8c] sm:$0xf]
  %v95 = vld [vmem:[%s1 + $0x90] sm:$0xf]
  %v96 = vld [vmem:[%s1 + $0x94] sm:$0xf]
  %v97 = vld [vmem:[%s1 + $0x98] sm:$0xf]
  %v98 = vld [vmem:[%s1 + $0x9c] sm:$0xf]
  %v99 = vld [vmem:[%s1 + $0xa0] sm:$0xf]
  %v100 = vld [vmem:[%s1 + $0xa4] sm:$0xf]
  %v101 = vld [vmem:[%s1 + $0xa8] sm:$0xf]
  %v102 = vld [vmem:[%s1 + $0xac] sm:$0xf]
  %v103 = vld [vmem:[%s1 + $0xb0] sm:$0xf]
  %v104 = vld [vmem:[%s1 + $0xb4] sm:$0xf]
  %v105 = vld [vmem:[%s1 + $0xb8] sm:$0xf]
  %v106 = vld [vmem:[%s1 + $0xbc] sm:$0xf]
  %v107 = vld [vmem:[%s1 + $0xc0] sm:$0xf]
  %v108 = vld [vmem:[%s1 + $0xc4] sm:$0xf]
  %v109 = vld [vmem:[%s1 + $0xc8] sm:$0xf]
  %v110 = vld [vmem:[%s1 + $0xcc] sm:$0xf]
  %v111 = vld [vmem:[%s1 + $0xd0] sm:$0xf]
  %v112 = vld [vmem:[%s1 + $0xd4] sm:$0xf]
  %v113 = vld [vmem:[%s1 + $0xd8] sm:$0xf]
  %v114 = vld [vmem:[%s1 + $0xdc] sm:$0xf]
  %v115 = vld [vmem:[%s2] sm:$0xff]
  %v116 = vld [vmem:[%s2 + $0x8] sm:$0xff]
  %v117 = vld [vmem:[%s2 + $0x10] sm:$0xff]
  %v118 = vld [vmem:[%s2 + $0x18] sm:$0xff]
  %v119 = vld [vmem:[%s2 + $0x20] sm:$0xff]
  %v120 = vld [vmem:[%s2 + $0x28] sm:$0xff]
  %v121 = vld [vmem:[%s2 + $0x30] sm:$0xff]
  %v122 = vld [vmem:[%s2 + $0x38] sm:$0xff]
  %v123 = vld [vmem:[%s2 + $0x40] sm:$0xff]
  %v124 = vld [vmem:[%s2 + $0x48] sm:$0xff]
  %v125 = vld [vmem:[%s2 + $0x50] sm:$0xff]
  %v126 = vld [vmem:[%s2 + $0x58] sm:$0xff]
  %v127 = vld [vmem:[%s2 + $0x60] sm:$0xff]
  %v128 = vld [vmem:[%s2 + $0x68] sm:$0xff]
  %v129 = vld [vmem:[%s2 + $0x70] sm:$0xff]
  %v130 = vld [vmem:[%s2 + $0x78] sm:$0xff]
  %v131 = vld [vmem:[%s2 + $0x80] sm:$0xff]
  %v132 = vld [vmem:[%s2 + $0x88] sm:$0xff]
  %v133 = vld [vmem:[%s2 + $0x90] sm:$0xff]
  %v134 = vld [vmem:[%s2 + $0x98] sm:$0xff]
  %v135 = vld [vmem:[%s2 + $0xa0] sm:$0xff]
  %v136 = vld [vmem:[%s2 + $0xa8] sm:$0xff]
  %v137 = vld [vmem:[%s2 + $0xb0] sm:$0xff]
  %v138 = vld [vmem:[%s2 + $0xb8] sm:$0xff]
  %v139 = vld [vmem:[%s2 + $0xc0] sm:$0xff]
  %v140 = vld [vmem:[%s2 + $0xc8] sm:$0xff]
  %v141 = vld [vmem:[%s2 + $0xd0] sm:$0xff]
  %v142 = vld [vmem:[%s2 + $0xd8] sm:$0xff]
  %v143 = vld [vmem:[%s2 + $0xe0] sm:$0xff]
  %v144 = vld [vmem:[%s2 + $0xe8] sm:$0xff]
  %v145 = vld [vmem:[%s2 + $0xf0] sm:$0xff]
  %v146 = vld [vmem:[%s2 + $0xf8] sm:$0xff]
  %v147 = vld [vmem:[%s2 + $0x100] sm:$0xff]
  %v148 = vld [vmem:[%s2 + $0x108] sm:$0xff]
  %v149 = vld [vmem:[%s2 + $0x110] sm:$0xff]
  %v150 = vld [vmem:[%s2 + $0x118] sm:$0xff]
  %v151 = vld [vmem:[%s2 + $0x120] sm:$0xff]
  %v152 = vld [vmem:[%s2 + $0x128] sm:$0xff]
  %v153 = vld [vmem:[%s2 + $0x130] sm:$0xff]
  %v154 = vld [vmem:[%s2 + $0x138] sm:$0xff]
  %v155 = vld [vmem:[%s2 + $0x140] sm:$0xff]
  %v156 = vld [vmem:[%s2 + $0x148] sm:$0xff]
  %v157 = vld [vmem:[%s2 + $0x150] sm:$0xff]
  %v158 = vld [vmem:[%s2 + $0x158] sm:$0xff]
  %v159 = vld [vmem:[%s2 + $0x160] sm:$0xff]
  %v160 = vld [vmem:[%s2 + $0x168] sm:$0xff]
  %v161 = vld [vmem:[%s2 + $0x170] sm:$0xff]
  %v162 = vld [vmem:[%s2 + $0x178] sm:$0xff]
  %v163 = vld [vmem:[%s2 + $0x180] sm:$0xff]
  %v164 = vld [vmem:[%s2 + $0x188] sm:$0xff]
  %v165 = vld [vmem:[%s2 + $0x190] sm:$0xff]
  %v166 = vld [vmem:[%s2 + $0x198] sm:$0xff]
  %v167 = vld [vmem:[%s2 + $0x1a0] sm:$0xff]
  %v168 = vld [vmem:[%s2 + $0x1a8] sm:$0xff]
  %v169 = vld [vmem:[%s2 + $0x1b0] sm:$0xff]
  %v170 = vld [vmem:[%s2 + $0x1b8] sm:$0xff]
  %172 = vset.pattern.permute.xlu0 0
  %173 = vperm.xlu0 %172, %v115
  %v174 = vpop.permute.xlu0 %173
  %177 = vset.pattern.permute.xlu0 0
  %178 = vperm.xlu0 %177, %v116
  %v179 = vpop.permute.xlu0 %178
  %182 = vset.pattern.permute.xlu0 0
  %183 = vperm.xlu0 %182, %v117
  %v184 = vpop.permute.xlu0 %183
  %187 = vset.pattern.permute.xlu0 0
  %188 = vperm.xlu0 %187, %v118
  %v189 = vpop.permute.xlu0 %188
  %192 = vset.pattern.permute.xlu0 0
  %193 = vperm.xlu0 %192, %v119
  %v194 = vpop.permute.xlu0 %193
  %197 = vset.pattern.permute.xlu0 0
  %198 = vperm.xlu0 %197, %v120
  %v199 = vpop.permute.xlu0 %198
  %202 = vset.pattern.permute.xlu0 0
  %203 = vperm.xlu0 %202, %v121
  %v204 = vpop.permute.xlu0 %203
  %207 = vset.pattern.permute.xlu0 0
  %208 = vperm.xlu0 %207, %v122
  %v209 = vpop.permute.xlu0 %208
  %212 = vset.pattern.permute.xlu0 0
  %213 = vperm.xlu0 %212, %v123
  %v214 = vpop.permute.xlu0 %213
  %217 = vset.pattern.permute.xlu0 0
  %218 = vperm.xlu0 %217, %v124
  %v219 = vpop.permute.xlu0 %218
  %222 = vset.pattern.permute.xlu0 0
  %223 = vperm.xlu0 %222, %v125
  %v224 = vpop.permute.xlu0 %223
  %227 = vset.pattern.permute.xlu0 0
  %228 = vperm.xlu0 %227, %v126
  %v229 = vpop.permute.xlu0 %228
  %232 = vset.pattern.permute.xlu0 0
  %233 = vperm.xlu0 %232, %v127
  %v234 = vpop.permute.xlu0 %233
  %237 = vset.pattern.permute.xlu0 0
  %238 = vperm.xlu0 %237, %v128
  %v239 = vpop.permute.xlu0 %238
  %242 = vset.pattern.permute.xlu0 0
  %243 = vperm.xlu0 %242, %v129
  %v244 = vpop.permute.xlu0 %243
  %247 = vset.pattern.permute.xlu0 0
  %248 = vperm.xlu0 %247, %v130
  %v249 = vpop.permute.xlu0 %248
  %252 = vset.pattern.permute.xlu0 0
  %253 = vperm.xlu0 %252, %v131
  %v254 = vpop.permute.xlu0 %253
  %257 = vset.pattern.permute.xlu0 0
  %258 = vperm.xlu0 %257, %v132
  %v259 = vpop.permute.xlu0 %258
  %262 = vset.pattern.permute.xlu0 0
  %263 = vperm.xlu0 %262, %v133
  %v264 = vpop.permute.xlu0 %263
  %267 = vset.pattern.permute.xlu0 0
  %268 = vperm.xlu0 %267, %v134
  %v269 = vpop.permute.xlu0 %268
  %272 = vset.pattern.permute.xlu0 0
  %273 = vperm.xlu0 %272, %v135
  %v274 = vpop.permute.xlu0 %273
  %277 = vset.pattern.permute.xlu0 0
  %278 = vperm.xlu0 %277, %v136
  %v279 = vpop.permute.xlu0 %278
  %282 = vset.pattern.permute.xlu0 0
  %283 = vperm.xlu0 %282, %v137
  %v284 = vpop.permute.xlu0 %283
  %287 = vset.pattern.permute.xlu0 0
  %288 = vperm.xlu0 %287, %v138
  %v289 = vpop.permute.xlu0 %288
  %292 = vset.pattern.permute.xlu0 0
  %293 = vperm.xlu0 %292, %v139
  %v294 = vpop.permute.xlu0 %293
  %297 = vset.pattern.permute.xlu0 0
  %298 = vperm.xlu0 %297, %v140
  %v299 = vpop.permute.xlu0 %298
  %302 = vset.pattern.permute.xlu0 0
  %303 = vperm.xlu0 %302, %v141
  %v304 = vpop.permute.xlu0 %303
  %307 = vset.pattern.permute.xlu0 0
  %308 = vperm.xlu0 %307, %v142
  %v309 = vpop.permute.xlu0 %308
  %312 = vset.pattern.permute.xlu0 0
  %313 = vperm.xlu0 %312, %v143
  %v314 = vpop.permute.xlu0 %313
  %317 = vset.pattern.permute.xlu0 0
  %318 = vperm.xlu0 %317, %v144
  %v319 = vpop.permute.xlu0 %318
  %322 = vset.pattern.permute.xlu0 0
  %323 = vperm.xlu0 %322, %v145
  %v324 = vpop.permute.xlu0 %323
  %327 = vset.pattern.permute.xlu0 0
  %328 = vperm.xlu0 %327, %v146
  %v329 = vpop.permute.xlu0 %328
  %332 = vset.pattern.permute.xlu0 0
  %333 = vperm.xlu0 %332, %v147
  %v334 = vpop.permute.xlu0 %333
  %337 = vset.pattern.permute.xlu0 0
  %338 = vperm.xlu0 %337, %v148
  %v339 = vpop.permute.xlu0 %338
  %342 = vset.pattern.permute.xlu0 0
  %343 = vperm.xlu0 %342, %v149
  %v344 = vpop.permute.xlu0 %343
  %347 = vset.pattern.permute.xlu0 0
  %348 = vperm.xlu0 %347, %v150
  %v349 = vpop.permute.xlu0 %348
  %352 = vset.pattern.permute.xlu0 0
  %353 = vperm.xlu0 %352, %v151
  %v354 = vpop.permute.xlu0 %353
  %357 = vset.pattern.permute.xlu0 0
  %358 = vperm.xlu0 %357, %v152
  %v359 = vpop.permute.xlu0 %358
  %362 = vset.pattern.permute.xlu0 0
  %363 = vperm.xlu0 %362, %v153
  %v364 = vpop.permute.xlu0 %363
  %367 = vset.pattern.permute.xlu0 0
  %368 = vperm.xlu0 %367, %v154
  %v369 = vpop.permute.xlu0 %368
  %372 = vset.pattern.permute.xlu0 0
  %373 = vperm.xlu0 %372, %v155
  %v374 = vpop.permute.xlu0 %373
  %377 = vset.pattern.permute.xlu0 0
  %378 = vperm.xlu0 %377, %v156
  %v379 = vpop.permute.xlu0 %378
  %382 = vset.pattern.permute.xlu0 0
  %383 = vperm.xlu0 %382, %v157
  %v384 = vpop.permute.xlu0 %383
  %387 = vset.pattern.permute.xlu0 0
  %388 = vperm.xlu0 %387, %v158
  %v389 = vpop.permute.xlu0 %388
  %392 = vset.pattern.permute.xlu0 0
  %393 = vperm.xlu0 %392, %v159
  %v394 = vpop.permute.xlu0 %393
  %397 = vset.pattern.permute.xlu0 0
  %398 = vperm.xlu0 %397, %v160
  %v399 = vpop.permute.xlu0 %398
  %402 = vset.pattern.permute.xlu0 0
  %403 = vperm.xlu0 %402, %v161
  %v404 = vpop.permute.xlu0 %403
  %407 = vset.pattern.permute.xlu0 0
  %408 = vperm.xlu0 %407, %v162
  %v409 = vpop.permute.xlu0 %408
  %412 = vset.pattern.permute.xlu0 0
  %413 = vperm.xlu0 %412, %v163
  %v414 = vpop.permute.xlu0 %413
  %417 = vset.pattern.permute.xlu0 0
  %418 = vperm.xlu0 %417, %v164
  %v419 = vpop.permute.xlu0 %418
  %422 = vset.pattern.permute.xlu0 0
  %423 = vperm.xlu0 %422, %v165
  %v424 = vpop.permute.xlu0 %423
  %427 = vset.pattern.permute.xlu0 0
  %428 = vperm.xlu0 %427, %v166
  %v429 = vpop.permute.xlu0 %428
  %432 = vset.pattern.permute.xlu0 0
  %433 = vperm.xlu0 %432, %v167
  %v434 = vpop.permute.xlu0 %433
  %437 = vset.pattern.permute.xlu0 0
  %438 = vperm.xlu0 %437, %v168
  %v439 = vpop.permute.xlu0 %438
  %442 = vset.pattern.permute.xlu0 0
  %443 = vperm.xlu0 %442, %v169
  %v444 = vpop.permute.xlu0 %443
  %447 = vset.pattern.permute.xlu0 0
  %448 = vperm.xlu0 %447, %v170
  %v449 = vpop.permute.xlu0 %448
  %v507 = vunpack.c.l.b16 %v59
  %v508 = vunpack.c.l.b16 %v60
  %v509 = vunpack.c.l.b16 %v61
  %v510 = vunpack.c.l.b16 %v62
  %v511 = vunpack.c.l.b16 %v63
  %v512 = vunpack.c.l.b16 %v64
  %v513 = vunpack.c.l.b16 %v65
  %v514 = vunpack.c.l.b16 %v66
  %v515 = vunpack.c.l.b16 %v67
  %v516 = vunpack.c.l.b16 %v68
  %v517 = vunpack.c.l.b16 %v69
  %v518 = vunpack.c.l.b16 %v70
  %v519 = vunpack.c.l.b16 %v71
  %v520 = vunpack.c.l.b16 %v72
  %v521 = vunpack.c.l.b16 %v73
  %v522 = vunpack.c.l.b16 %v74
  %v523 = vunpack.c.l.b16 %v75
  %v524 = vunpack.c.l.b16 %v76
  %v525 = vunpack.c.l.b16 %v77
  %v526 = vunpack.c.l.b16 %v78
  %v527 = vunpack.c.l.b16 %v79
  %v528 = vunpack.c.l.b16 %v80
  %v529 = vunpack.c.l.b16 %v81
  %v530 = vunpack.c.l.b16 %v82
  %v531 = vunpack.c.l.b16 %v83
  %v532 = vunpack.c.l.b16 %v84
  %v533 = vunpack.c.l.b16 %v85
  %v534 = vunpack.c.l.b16 %v86
  %v535 = vunpack.c.l.b16 %v87
  %v536 = vunpack.c.l.b16 %v88
  %v537 = vunpack.c.l.b16 %v89
  %v538 = vunpack.c.l.b16 %v90
  %v539 = vunpack.c.l.b16 %v91
  %v540 = vunpack.c.l.b16 %v92
  %v541 = vunpack.c.l.b16 %v93
  %v542 = vunpack.c.l.b16 %v94
  %v543 = vunpack.c.l.b16 %v95
  %v544 = vunpack.c.l.b16 %v96
  %v545 = vunpack.c.l.b16 %v97
  %v546 = vunpack.c.l.b16 %v98
  %v547 = vunpack.c.l.b16 %v99
  %v548 = vunpack.c.l.b16 %v100
  %v549 = vunpack.c.l.b16 %v101
  %v550 = vunpack.c.l.b16 %v102
  %v551 = vunpack.c.l.b16 %v103
  %v552 = vunpack.c.l.b16 %v104
  %v553 = vunpack.c.l.b16 %v105
  %v554 = vunpack.c.l.b16 %v106
  %v555 = vunpack.c.l.b16 %v107
  %v556 = vunpack.c.l.b16 %v108
  %v557 = vunpack.c.l.b16 %v109
  %v558 = vunpack.c.l.b16 %v110
  %v559 = vunpack.c.l.b16 %v111
  %v560 = vunpack.c.l.b16 %v112
  %v561 = vunpack.c.l.b16 %v113
  %v562 = vunpack.c.l.b16 %v114
  %v563 = vpack.c.b16 %v508, %v507
  %v564 = vpack.c.b16 %v510, %v509
  %v565 = vpack.c.b16 %v512, %v511
  %v566 = vpack.c.b16 %v514, %v513
  %v567 = vpack.c.b16 %v516, %v515
  %v568 = vpack.c.b16 %v518, %v517
  %v569 = vpack.c.b16 %v520, %v519
  %v570 = vpack.c.b16 %v522, %v521
  %v571 = vpack.c.b16 %v524, %v523
  %v572 = vpack.c.b16 %v526, %v525
  %v573 = vpack.c.b16 %v528, %v527
  %v574 = vpack.c.b16 %v530, %v529
  %v575 = vpack.c.b16 %v532, %v531
  %v576 = vpack.c.b16 %v534, %v533
  %v577 = vpack.c.b16 %v536, %v535
  %v578 = vpack.c.b16 %v538, %v537
  %v579 = vpack.c.b16 %v540, %v539
  %v580 = vpack.c.b16 %v542, %v541
  %v581 = vpack.c.b16 %v544, %v543
  %v582 = vpack.c.b16 %v546, %v545
  %v583 = vpack.c.b16 %v548, %v547
  %v584 = vpack.c.b16 %v550, %v549
  %v585 = vpack.c.b16 %v552, %v551
  %v586 = vpack.c.b16 %v554, %v553
  %v587 = vpack.c.b16 %v556, %v555
  %v588 = vpack.c.b16 %v558, %v557
  %v589 = vpack.c.b16 %v560, %v559
  %v590 = vpack.c.b16 %v562, %v561
  %vm591 = vcmask 244736
  %v593 = vsel %vm591, %v563, 0
  %v596 = vsel %vm591, %v564, 0
  %v599 = vsel %vm591, %v565, 0
  %v602 = vsel %vm591, %v566, 0
  %v605 = vsel %vm591, %v567, 0
  %v608 = vsel %vm591, %v568, 0
  %v611 = vsel %vm591, %v569, 0
  %v614 = vsel %vm591, %v570, 0
  %v617 = vsel %vm591, %v571, 0
  %v620 = vsel %vm591, %v572, 0
  %v623 = vsel %vm591, %v573, 0
  %v626 = vsel %vm591, %v574, 0
  %v629 = vsel %vm591, %v575, 0
  %v632 = vsel %vm591, %v576, 0
  %v635 = vsel %vm591, %v577, 0
  %v638 = vsel %vm591, %v578, 0
  %v641 = vsel %vm591, %v579, 0
  %v644 = vsel %vm591, %v580, 0
  %v647 = vsel %vm591, %v581, 0
  %v650 = vsel %vm591, %v582, 0
  %v653 = vsel %vm591, %v583, 0
  %v656 = vsel %vm591, %v584, 0
  %v659 = vsel %vm591, %v585, 0
  %v662 = vsel %vm591, %v586, 0
  %v665 = vsel %vm591, %v587, 0
  %v668 = vsel %vm591, %v588, 0
  %v671 = vsel %vm591, %v589, 0
  %v674 = vsel %vm591, %v590, 0
  %v677 = vsel %vm591, %v51, 0
  %v680 = vsel %vm591, %v52, 0
  %v683 = vsel %vm591, %v53, 0
  %v686 = vsel %vm591, %v54, 0
  %v689 = vsel %vm591, %v55, 0
  %v692 = vsel %vm591, %v56, 0
  %v695 = vsel %vm591, %v57, 0
  %v698 = vsel %vm591, %v58, 0
  %700 = vmatpush.bf16.xpose.msra.mxu0 %v698
  %701 = vmatpush.bf16.xpose.msra.mxu0 %v695
  %702 = vmatpush.bf16.xpose.msra.mxu0 %v692
  %703 = vmatpush.bf16.xpose.msra.mxu0 %v689
  %704 = vmatpush.bf16.xpose.msra.mxu0 %v686
  %705 = vmatpush.bf16.xpose.msra.mxu0 %v683
  %706 = vmatpush.bf16.xpose.msra.mxu0 %v680
  %707 = vmatpush.bf16.xpose.msra.mxu0 %v677
  %708 = vmatmul.bf16.gmra.mxu0 %v593
  %v709 = vpop.f32.mrf.mxu0
  %v710 = vadd.f32 %v174, %v709
  %v711 = vpop.f32.mrf.mxu0
  %v712 = vadd.f32 %v179, %v711
  %713 = vmatmul.bf16.gmra.mxu0 %v596
  %v714 = vpop.f32.mrf.mxu0
  %v715 = vadd.f32 %v184, %v714
  %v716 = vpop.f32.mrf.mxu0
  %v717 = vadd.f32 %v189, %v716
  %718 = vmatmul.bf16.gmra.mxu0 %v599
  %v719 = vpop.f32.mrf.mxu0
  %v720 = vadd.f32 %v194, %v719
  %v721 = vpop.f32.mrf.mxu0
  %v722 = vadd.f32 %v199, %v721
  %723 = vmatmul.bf16.gmra.mxu0 %v602
  %v724 = vpop.f32.mrf.mxu0
  %v725 = vadd.f32 %v204, %v724
  %v726 = vpop.f32.mrf.mxu0
  %v727 = vadd.f32 %v209, %v726
  %728 = vmatmul.bf16.gmra.mxu0 %v605
  %v729 = vpop.f32.mrf.mxu0
  %v730 = vadd.f32 %v214, %v729
  %v731 = vpop.f32.mrf.mxu0
  %v732 = vadd.f32 %v219, %v731
  %733 = vmatmul.bf16.gmra.mxu0 %v608
  %v734 = vpop.f32.mrf.mxu0
  %v735 = vadd.f32 %v224, %v734
  %v736 = vpop.f32.mrf.mxu0
  %v737 = vadd.f32 %v229, %v736
  %738 = vmatmul.bf16.gmra.mxu0 %v611
  %v739 = vpop.f32.mrf.mxu0
  %v740 = vadd.f32 %v234, %v739
  %v741 = vpop.f32.mrf.mxu0
  %v742 = vadd.f32 %v239, %v741
  %743 = vmatmul.bf16.gmra.mxu0 %v614
  %v744 = vpop.f32.mrf.mxu0
  %v745 = vadd.f32 %v244, %v744
  %v746 = vpop.f32.mrf.mxu0
  %v747 = vadd.f32 %v249, %v746
  %748 = vmatmul.bf16.gmra.mxu0 %v617
  %v749 = vpop.f32.mrf.mxu0
  %v750 = vadd.f32 %v254, %v749
  %v751 = vpop.f32.mrf.mxu0
  %v752 = vadd.f32 %v259, %v751
  %753 = vmatmul.bf16.gmra.mxu0 %v620
  %v754 = vpop.f32.mrf.mxu0
  %v755 = vadd.f32 %v264, %v754
  %v756 = vpop.f32.mrf.mxu0
  %v757 = vadd.f32 %v269, %v756
  %758 = vmatmul.bf16.gmra.mxu0 %v623
  %v759 = vpop.f32.mrf.mxu0
  %v760 = vadd.f32 %v274, %v759
  %v761 = vpop.f32.mrf.mxu0
  %v762 = vadd.f32 %v279, %v761
  %763 = vmatmul.bf16.gmra.mxu0 %v626
  %v764 = vpop.f32.mrf.mxu0
  %v765 = vadd.f32 %v284, %v764
  %v766 = vpop.f32.mrf.mxu0
  %v767 = vadd.f32 %v289, %v766
  %768 = vmatmul.bf16.gmra.mxu0 %v629
  %v769 = vpop.f32.mrf.mxu0
  %v770 = vadd.f32 %v294, %v769
  %v771 = vpop.f32.mrf.mxu0
  %v772 = vadd.f32 %v299, %v771
  %773 = vmatmul.bf16.gmra.mxu0 %v632
  %v774 = vpop.f32.mrf.mxu0
  %v775 = vadd.f32 %v304, %v774
  %v776 = vpop.f32.mrf.mxu0
  %v777 = vadd.f32 %v309, %v776
  %778 = vmatmul.bf16.gmra.mxu0 %v635
  %v779 = vpop.f32.mrf.mxu0
  %v780 = vadd.f32 %v314, %v779
  %v781 = vpop.f32.mrf.mxu0
  %v782 = vadd.f32 %v319, %v781
  %783 = vmatmul.bf16.gmra.mxu0 %v638
  %v784 = vpop.f32.mrf.mxu0
  %v785 = vadd.f32 %v324, %v784
  %v786 = vpop.f32.mrf.mxu0
  %v787 = vadd.f32 %v329, %v786
  %788 = vmatmul.bf16.gmra.mxu0 %v641
  %v789 = vpop.f32.mrf.mxu0
  %v790 = vadd.f32 %v334, %v789
  %v791 = vpop.f32.mrf.mxu0
  %v792 = vadd.f32 %v339, %v791
  %793 = vmatmul.bf16.gmra.mxu0 %v644
  %v794 = vpop.f32.mrf.mxu0
  %v795 = vadd.f32 %v344, %v794
  %v796 = vpop.f32.mrf.mxu0
  %v797 = vadd.f32 %v349, %v796
  %798 = vmatmul.bf16.gmra.mxu0 %v647
  %v799 = vpop.f32.mrf.mxu0
  %v800 = vadd.f32 %v354, %v799
  %v801 = vpop.f32.mrf.mxu0
  %v802 = vadd.f32 %v359, %v801
  %803 = vmatmul.bf16.gmra.mxu0 %v650
  %v804 = vpop.f32.mrf.mxu0
  %v805 = vadd.f32 %v364, %v804
  %v806 = vpop.f32.mrf.mxu0
  %v807 = vadd.f32 %v369, %v806
  %808 = vmatmul.bf16.gmra.mxu0 %v653
  %v809 = vpop.f32.mrf.mxu0
  %v810 = vadd.f32 %v374, %v809
  %v811 = vpop.f32.mrf.mxu0
  %v812 = vadd.f32 %v379, %v811
  %813 = vmatmul.bf16.gmra.mxu0 %v656
  %v814 = vpop.f32.mrf.mxu0
  %v815 = vadd.f32 %v384, %v814
  %v816 = vpop.f32.mrf.mxu0
  %v817 = vadd.f32 %v389, %v816
  %818 = vmatmul.bf16.gmra.mxu0 %v659
  %v819 = vpop.f32.mrf.mxu0
  %v820 = vadd.f32 %v394, %v819
  %v821 = vpop.f32.mrf.mxu0
  %v822 = vadd.f32 %v399, %v821
  %823 = vmatmul.bf16.gmra.mxu0 %v662
  %v824 = vpop.f32.mrf.mxu0
  %v825 = vadd.f32 %v404, %v824
  %v826 = vpop.f32.mrf.mxu0
  %v827 = vadd.f32 %v409, %v826
  %828 = vmatmul.bf16.gmra.mxu0 %v665
  %v829 = vpop.f32.mrf.mxu0
  %v830 = vadd.f32 %v414, %v829
  %v831 = vpop.f32.mrf.mxu0
  %v832 = vadd.f32 %v419, %v831
  %833 = vmatmul.bf16.gmra.mxu0 %v668
  %v834 = vpop.f32.mrf.mxu0
  %v835 = vadd.f32 %v424, %v834
  %v836 = vpop.f32.mrf.mxu0
  %v837 = vadd.f32 %v429, %v836
  %838 = vmatmul.bf16.gmra.mxu0 %v671
  %v839 = vpop.f32.mrf.mxu0
  %v840 = vadd.f32 %v434, %v839
  %v841 = vpop.f32.mrf.mxu0
  %v842 = vadd.f32 %v439, %v841
  %843 = vmatmul.bf16.gmra.mxu0 %v674
  %v844 = vpop.f32.mrf.mxu0
  %v845 = vadd.f32 %v444, %v844
  %v846 = vpop.f32.mrf.mxu0
  %v847 = vadd.f32 %v449, %v846
  %848 = vdwg.mxu0
  %v849 = vmax.f32 %v710, 0.0
  %v850 = vmax.f32 %v712, 0.0
  %v851 = vmax.f32 %v715, 0.0
  %v852 = vmax.f32 %v717, 0.0
  %v853 = vmax.f32 %v720, 0.0
  %v854 = vmax.f32 %v722, 0.0
  %v855 = vmax.f32 %v725, 0.0
  %v856 = vmax.f32 %v727, 0.0
  %v857 = vmax.f32 %v730, 0.0
  %v858 = vmax.f32 %v732, 0.0
  %v859 = vmax.f32 %v735, 0.0
  %v860 = vmax.f32 %v737, 0.0
  %v861 = vmax.f32 %v740, 0.0
  %v862 = vmax.f32 %v742, 0.0
  %v863 = vmax.f32 %v745, 0.0
  %v864 = vmax.f32 %v747, 0.0
  %v865 = vmax.f32 %v750, 0.0
  %v866 = vmax.f32 %v752, 0.0
  %v867 = vmax.f32 %v755, 0.0
  %v868 = vmax.f32 %v757, 0.0
  %v869 = vmax.f32 %v760, 0.0
  %v870 = vmax.f32 %v762, 0.0
  %v871 = vmax.f32 %v765, 0.0
  %v872 = vmax.f32 %v767, 0.0
  %v873 = vmax.f32 %v770, 0.0
  %v874 = vmax.f32 %v772, 0.0
  %v875 = vmax.f32 %v775, 0.0
  %v876 = vmax.f32 %v777, 0.0
  %v877 = vmax.f32 %v780, 0.0
  %v878 = vmax.f32 %v782, 0.0
  %v879 = vmax.f32 %v785, 0.0
  %v880 = vmax.f32 %v787, 0.0
  %v881 = vmax.f32 %v790, 0.0
  %v882 = vmax.f32 %v792, 0.0
  %v883 = vmax.f32 %v795, 0.0
  %v884 = vmax.f32 %v797, 0.0
  %v885 = vmax.f32 %v800, 0.0
  %v886 = vmax.f32 %v802, 0.0
  %v887 = vmax.f32 %v805, 0.0
  %v888 = vmax.f32 %v807, 0.0
  %v889 = vmax.f32 %v810, 0.0
  %v890 = vmax.f32 %v812, 0.0
  %v891 = vmax.f32 %v815, 0.0
  %v892 = vmax.f32 %v817, 0.0
  %v893 = vmax.f32 %v820, 0.0
  %v894 = vmax.f32 %v822, 0.0
  %v895 = vmax.f32 %v825, 0.0
  %v896 = vmax.f32 %v827, 0.0
  %v897 = vmax.f32 %v830, 0.0
  %v898 = vmax.f32 %v832, 0.0
  %v899 = vmax.f32 %v835, 0.0
  %v900 = vmax.f32 %v837, 0.0
  %v901 = vmax.f32 %v840, 0.0
  %v902 = vmax.f32 %v842, 0.0
  %v903 = vmax.f32 %v845, 0.0
  %v904 = vmax.f32 %v847, 0.0
  %v905 = vmax.f32 %v849, %v851
  %v906 = vmax.f32 %v850, %v852
  %v907 = vmax.f32 %v853, %v855
  %v908 = vmax.f32 %v854, %v856
  %v909 = vmax.f32 %v857, %v859
  %v910 = vmax.f32 %v858, %v860
  %v911 = vmax.f32 %v861, %v863
  %v912 = vmax.f32 %v862, %v864
  %v913 = vmax.f32 %v865, %v867
  %v914 = vmax.f32 %v866, %v868
  %v915 = vmax.f32 %v869, %v871
  %v916 = vmax.f32 %v870, %v872
  %v917 = vmax.f32 %v873, %v875
  %v918 = vmax.f32 %v874, %v876
  %v919 = vmax.f32 %v877, %v879
  %v920 = vmax.f32 %v878, %v880
  %v921 = vmax.f32 %v881, %v883
  %v922 = vmax.f32 %v882, %v884
  %v923 = vmax.f32 %v885, %v887
  %v924 = vmax.f32 %v886, %v888
  %v925 = vmax.f32 %v889, %v891
  %v926 = vmax.f32 %v890, %v892
  %v927 = vmax.f32 %v893, %v895
  %v928 = vmax.f32 %v894, %v896
  %v929 = vmax.f32 %v897, %v899
  %v930 = vmax.f32 %v898, %v900
  %v931 = vmax.f32 %v901, %v903
  %v932 = vmax.f32 %v902, %v904
  %v933 = vpack.c.bf16 %v906, %v905
  %v934 = vpack.c.bf16 %v908, %v907
  %v935 = vpack.c.bf16 %v910, %v909
  %v936 = vpack.c.bf16 %v912, %v911
  %v937 = vpack.c.bf16 %v914, %v913
  %v938 = vpack.c.bf16 %v916, %v915
  %v939 = vpack.c.bf16 %v918, %v917
  %v940 = vpack.c.bf16 %v920, %v919
  %v941 = vpack.c.bf16 %v922, %v921
  %v942 = vpack.c.bf16 %v924, %v923
  %v943 = vpack.c.bf16 %v926, %v925
  %v944 = vpack.c.bf16 %v928, %v927
  %v945 = vpack.c.bf16 %v930, %v929
  %v946 = vpack.c.bf16 %v932, %v931
  %v947 = vld [vmem:[%s3] sm:$0xff]
  %v948 = vld [vmem:[%s3 + $0x8] sm:$0xff]
  %v949 = vld [vmem:[%s3 + $0x10] sm:$0xff]
  %v950 = vld [vmem:[%s3 + $0x18] sm:$0xff]
  %v951 = vld [vmem:[%s3 + $0x20] sm:$0xff]
  %v952 = vld [vmem:[%s3 + $0x28] sm:$0xff]
  %v953 = vld [vmem:[%s3 + $0x30] sm:$0xff]
  %v954 = vld [vmem:[%s3 + $0x38] sm:$0xff]
  %v955 = vld [vmem:[%s3 + $0x40] sm:$0xff]
  %v956 = vld [vmem:[%s3 + $0x48] sm:$0xff]
  %v957 = vld [vmem:[%s3 + $0x50] sm:$0xff]
  %v958 = vld [vmem:[%s3 + $0x58] sm:$0xff]
  %v959 = vld [vmem:[%s3 + $0x60] sm:$0xff]
  %v960 = vld [vmem:[%s3 + $0x68] sm:$0xff]
  %v961 = vld [vmem:[%s3 + $0x70] sm:$0xff]
  %v962 = vld [vmem:[%s3 + $0x78] sm:$0xff]
  %v963 = vld [vmem:[%s3 + $0x80] sm:$0xff]
  %v964 = vld [vmem:[%s3 + $0x88] sm:$0xff]
  %v965 = vld [vmem:[%s3 + $0x90] sm:$0xff]
  %v966 = vld [vmem:[%s3 + $0x98] sm:$0xff]
  %v967 = vld [vmem:[%s3 + $0xa0] sm:$0xff]
  %v968 = vld [vmem:[%s3 + $0xa8] sm:$0xff]
  %v969 = vld [vmem:[%s3 + $0xb0] sm:$0xff]
  %v970 = vld [vmem:[%s3 + $0xb8] sm:$0xff]
  %v971 = vld [vmem:[%s3 + $0xc0] sm:$0xff]
  %v972 = vld [vmem:[%s3 + $0xc8] sm:$0xff]
  %v973 = vld [vmem:[%s3 + $0xd0] sm:$0xff]
  %v974 = vld [vmem:[%s3 + $0xd8] sm:$0xff]
  %v975 = vld [vmem:[%s3 + $0xe0] sm:$0xff]
  %v976 = vld [vmem:[%s3 + $0xe8] sm:$0xff]
  %v977 = vld [vmem:[%s3 + $0xf0] sm:$0xff]
  %v978 = vld [vmem:[%s3 + $0xf8] sm:$0xff]
  %v979 = vld [vmem:[%s3 + $0x100] sm:$0xff]
  %v980 = vld [vmem:[%s3 + $0x108] sm:$0xff]
  %v981 = vld [vmem:[%s3 + $0x110] sm:$0xff]
  %v982 = vld [vmem:[%s3 + $0x118] sm:$0xff]
  %v983 = vld [vmem:[%s3 + $0x120] sm:$0xff]
  %v984 = vld [vmem:[%s3 + $0x128] sm:$0xff]
  %v985 = vld [vmem:[%s3 + $0x130] sm:$0xff]
  %v986 = vld [vmem:[%s3 + $0x138] sm:$0xff]
  %v987 = vld [vmem:[%s3 + $0x140] sm:$0xff]
  %v988 = vld [vmem:[%s3 + $0x148] sm:$0xff]
  %v989 = vld [vmem:[%s3 + $0x150] sm:$0xff]
  %v990 = vld [vmem:[%s3 + $0x158] sm:$0xff]
  %v991 = vld [vmem:[%s3 + $0x160] sm:$0xff]
  %v992 = vld [vmem:[%s3 + $0x168] sm:$0xff]
  %v993 = vld [vmem:[%s3 + $0x170] sm:$0xff]
  %v994 = vld [vmem:[%s3 + $0x178] sm:$0xff]
  %v1043 = vunpack.c.l.b16 %v947
  %v1044 = vunpack.c.h.b16 %v947
  %v1045 = vunpack.c.l.b16 %v948
  %v1046 = vunpack.c.h.b16 %v948
  %v1047 = vunpack.c.l.b16 %v949
  %v1048 = vunpack.c.h.b16 %v949
  %v1049 = vunpack.c.l.b16 %v950
  %v1050 = vunpack.c.h.b16 %v950
  %v1051 = vunpack.c.l.b16 %v951
  %v1052 = vunpack.c.h.b16 %v951
  %v1053 = vunpack.c.l.b16 %v952
  %v1054 = vunpack.c.h.b16 %v952
  %v1055 = vunpack.c.l.b16 %v953
  %v1056 = vunpack.c.h.b16 %v953
  %v1057 = vunpack.c.l.b16 %v954
  %v1058 = vunpack.c.h.b16 %v954
  %v1059 = vunpack.c.l.b16 %v955
  %v1060 = vunpack.c.h.b16 %v955
  %v1061 = vunpack.c.l.b16 %v956
  %v1062 = vunpack.c.h.b16 %v956
  %v1063 = vunpack.c.l.b16 %v957
  %v1064 = vunpack.c.h.b16 %v957
  %v1065 = vunpack.c.l.b16 %v958
  %v1066 = vunpack.c.h.b16 %v958
  %v1067 = vunpack.c.l.b16 %v959
  %v1068 = vunpack.c.h.b16 %v959
  %v1069 = vunpack.c.l.b16 %v960
  %v1070 = vunpack.c.h.b16 %v960
  %v1071 = vunpack.c.l.b16 %v961
  %v1072 = vunpack.c.h.b16 %v961
  %v1073 = vunpack.c.l.b16 %v962
  %v1074 = vunpack.c.h.b16 %v962
  %v1075 = vunpack.c.l.b16 %v963
  %v1076 = vunpack.c.h.b16 %v963
  %v1077 = vunpack.c.l.b16 %v964
  %v1078 = vunpack.c.h.b16 %v964
  %v1079 = vunpack.c.l.b16 %v965
  %v1080 = vunpack.c.h.b16 %v965
  %v1081 = vunpack.c.l.b16 %v966
  %v1082 = vunpack.c.h.b16 %v966
  %v1083 = vunpack.c.l.b16 %v967
  %v1084 = vunpack.c.h.b16 %v967
  %v1085 = vunpack.c.l.b16 %v968
  %v1086 = vunpack.c.h.b16 %v968
  %v1087 = vunpack.c.l.b16 %v969
  %v1088 = vunpack.c.h.b16 %v969
  %v1089 = vunpack.c.l.b16 %v970
  %v1090 = vunpack.c.h.b16 %v970
  %v1091 = vunpack.c.l.b16 %v971
  %v1092 = vunpack.c.h.b16 %v971
  %v1093 = vunpack.c.l.b16 %v972
  %v1094 = vunpack.c.h.b16 %v972
  %v1095 = vunpack.c.l.b16 %v973
  %v1096 = vunpack.c.h.b16 %v973
  %v1097 = vunpack.c.l.b16 %v974
  %v1098 = vunpack.c.h.b16 %v974
  %v1099 = vunpack.c.l.b16 %v975
  %v1100 = vunpack.c.h.b16 %v975
  %v1101 = vunpack.c.l.b16 %v976
  %v1102 = vunpack.c.h.b16 %v976
  %v1103 = vunpack.c.l.b16 %v977
  %v1104 = vunpack.c.h.b16 %v977
  %v1105 = vunpack.c.l.b16 %v978
  %v1106 = vunpack.c.h.b16 %v978
  %v1107 = vunpack.c.l.b16 %v979
  %v1108 = vunpack.c.h.b16 %v979
  %v1109 = vunpack.c.l.b16 %v980
  %v1110 = vunpack.c.h.b16 %v980
  %v1111 = vunpack.c.l.b16 %v981
  %v1112 = vunpack.c.h.b16 %v981
  %v1113 = vunpack.c.l.b16 %v982
  %v1114 = vunpack.c.h.b16 %v982
  %v1115 = vunpack.c.l.b16 %v983
  %v1116 = vunpack.c.h.b16 %v983
  %v1117 = vunpack.c.l.b16 %v984
  %v1118 = vunpack.c.h.b16 %v984
  %v1119 = vunpack.c.l.b16 %v985
  %v1120 = vunpack.c.h.b16 %v985
  %v1121 = vunpack.c.l.b16 %v986
  %v1122 = vunpack.c.h.b16 %v986
  %v1123 = vunpack.c.l.b16 %v987
  %v1124 = vunpack.c.h.b16 %v987
  %v1125 = vunpack.c.l.b16 %v988
  %v1126 = vunpack.c.h.b16 %v988
  %v1127 = vunpack.c.l.b16 %v989
  %v1128 = vunpack.c.h.b16 %v989
  %v1129 = vunpack.c.l.b16 %v990
  %v1130 = vunpack.c.h.b16 %v990
  %v1131 = vunpack.c.l.b16 %v991
  %v1132 = vunpack.c.h.b16 %v991
  %v1133 = vunpack.c.l.b16 %v992
  %v1134 = vunpack.c.h.b16 %v992
  %v1135 = vunpack.c.l.b16 %v993
  %v1136 = vunpack.c.h.b16 %v993
  %v1137 = vunpack.c.l.b16 %v994
  %v1138 = vunpack.c.h.b16 %v994
  %v1139 = vpack.c.b16 %v1045, %v1043
  %v1140 = vpack.c.b16 %v1046, %v1044
  %v1141 = vpack.c.b16 %v1049, %v1047
  %v1142 = vpack.c.b16 %v1050, %v1048
  %v1143 = vpack.c.b16 %v1053, %v1051
  %v1144 = vpack.c.b16 %v1054, %v1052
  %v1145 = vpack.c.b16 %v1057, %v1055
  %v1146 = vpack.c.b16 %v1058, %v1056
  %v1147 = vpack.c.b16 %v1061, %v1059
  %v1148 = vpack.c.b16 %v1062, %v1060
  %v1149 = vpack.c.b16 %v1065, %v1063
  %v1150 = vpack.c.b16 %v1066, %v1064
  %v1151 = vpack.c.b16 %v1069, %v1067
  %v1152 = vpack.c.b16 %v1070, %v1068
  %v1153 = vpack.c.b16 %v1073, %v1071
  %v1154 = vpack.c.b16 %v1074, %v1072
  %v1155 = vpack.c.b16 %v1077, %v1075
  %v1156 = vpack.c.b16 %v1078, %v1076
  %v1157 = vpack.c.b16 %v1081, %v1079
  %v1158 = vpack.c.b16 %v1082, %v1080
  %v1159 = vpack.c.b16 %v1085, %v1083
  %v1160 = vpack.c.b16 %v1086, %v1084
  %v1161 = vpack.c.b16 %v1089, %v1087
  %v1162 = vpack.c.b16 %v1090, %v1088
  %v1163 = vpack.c.b16 %v1093, %v1091
  %v1164 = vpack.c.b16 %v1094, %v1092
  %v1165 = vpack.c.b16 %v1097, %v1095
  %v1166 = vpack.c.b16 %v1098, %v1096
  %v1167 = vpack.c.b16 %v1101, %v1099
  %v1168 = vpack.c.b16 %v1102, %v1100
  %v1169 = vpack.c.b16 %v1105, %v1103
  %v1170 = vpack.c.b16 %v1106, %v1104
  %v1171 = vpack.c.b16 %v1109, %v1107
  %v1172 = vpack.c.b16 %v1110, %v1108
  %v1173 = vpack.c.b16 %v1113, %v1111
  %v1174 = vpack.c.b16 %v1114, %v1112
  %v1175 = vpack.c.b16 %v1117, %v1115
  %v1176 = vpack.c.b16 %v1118, %v1116
  %v1177 = vpack.c.b16 %v1121, %v1119
  %v1178 = vpack.c.b16 %v1122, %v1120
  %v1179 = vpack.c.b16 %v1125, %v1123
  %v1180 = vpack.c.b16 %v1126, %v1124
  %v1181 = vpack.c.b16 %v1129, %v1127
  %v1182 = vpack.c.b16 %v1130, %v1128
  %v1183 = vpack.c.b16 %v1133, %v1131
  %v1184 = vpack.c.b16 %v1134, %v1132
  %v1185 = vpack.c.b16 %v1137, %v1135
  %v1186 = vpack.c.b16 %v1138, %v1136
  %vm1211 = vcmask 785408
  %v1213 = vsel %vm1211, %v1140, 0
  %v1216 = vsel %vm1211, %v1142, 0
  %v1219 = vsel %vm1211, %v1144, 0
  %v1222 = vsel %vm1211, %v1146, 0
  %v1225 = vsel %vm1211, %v1148, 0
  %v1228 = vsel %vm1211, %v1150, 0
  %v1231 = vsel %vm1211, %v1152, 0
  %v1234 = vsel %vm1211, %v1154, 0
  %v1237 = vsel %vm1211, %v1156, 0
  %v1240 = vsel %vm1211, %v1158, 0
  %v1243 = vsel %vm1211, %v1160, 0
  %v1246 = vsel %vm1211, %v1162, 0
  %v1249 = vsel %vm1211, %v1164, 0
  %v1252 = vsel %vm1211, %v1166, 0
  %v1255 = vsel %vm1211, %v1168, 0
  %v1258 = vsel %vm1211, %v1170, 0
  %v1261 = vsel %vm1211, %v1172, 0
  %v1264 = vsel %vm1211, %v1174, 0
  %v1267 = vsel %vm1211, %v1176, 0
  %v1270 = vsel %vm1211, %v1178, 0
  %v1273 = vsel %vm1211, %v1180, 0
  %v1276 = vsel %vm1211, %v1182, 0
  %v1279 = vsel %vm1211, %v1184, 0
  %v1282 = vsel %vm1211, %v1186, 0
  %1284 = vmatpush.bf16.msra.mxu0 %v940
  %1285 = vmatpush.bf16.msra.mxu0 %v939
  %1286 = vmatpush.bf16.msra.mxu0 %v938
  %1287 = vmatpush.bf16.msra.mxu0 %v937
  %1288 = vmatpush.bf16.msra.mxu0 %v936
  %1289 = vmatpush.bf16.msra.mxu0 %v935
  %1290 = vmatpush.bf16.msra.mxu0 %v934
  %1291 = vmatpush.bf16.msra.mxu0 %v933
  %1292 = vmatmul.bf16.gmra.mxu0 %v1139
  %v1293 = vpop.f32.mrf.mxu0
  %v1294 = vadd.f32 0.0, %v1293
  %v1295 = vpop.f32.mrf.mxu0
  %v1296 = vadd.f32 0.0, %v1295
  %1297 = vmatmul.bf16.gmra.mxu0 %v1141
  %v1298 = vpop.f32.mrf.mxu0
  %v1299 = vadd.f32 0.0, %v1298
  %v1300 = vpop.f32.mrf.mxu0
  %v1301 = vadd.f32 0.0, %v1300
  %1302 = vmatmul.bf16.gmra.mxu0 %v1143
  %v1303 = vpop.f32.mrf.mxu0
  %v1304 = vadd.f32 0.0, %v1303
  %v1305 = vpop.f32.mrf.mxu0
  %v1306 = vadd.f32 0.0, %v1305
  %1307 = vmatmul.bf16.gmra.mxu0 %v1145
  %v1308 = vpop.f32.mrf.mxu0
  %v1309 = vadd.f32 0.0, %v1308
  %v1310 = vpop.f32.mrf.mxu0
  %v1311 = vadd.f32 0.0, %v1310
  %1312 = vmatmul.bf16.gmra.mxu0 %v1147
  %v1313 = vpop.f32.mrf.mxu0
  %v1314 = vadd.f32 0.0, %v1313
  %v1315 = vpop.f32.mrf.mxu0
  %v1316 = vadd.f32 0.0, %v1315
  %1317 = vmatmul.bf16.gmra.mxu0 %v1149
  %v1318 = vpop.f32.mrf.mxu0
  %v1319 = vadd.f32 0.0, %v1318
  %v1320 = vpop.f32.mrf.mxu0
  %v1321 = vadd.f32 0.0, %v1320
  %1322 = vmatmul.bf16.gmra.mxu0 %v1151
  %v1323 = vpop.f32.mrf.mxu0
  %v1324 = vadd.f32 0.0, %v1323
  %v1325 = vpop.f32.mrf.mxu0
  %v1326 = vadd.f32 0.0, %v1325
  %1327 = vmatmul.bf16.gmra.mxu0 %v1153
  %v1328 = vpop.f32.mrf.mxu0
  %v1329 = vadd.f32 0.0, %v1328
  %v1330 = vpop.f32.mrf.mxu0
  %v1331 = vadd.f32 0.0, %v1330
  %1332 = vmatmul.bf16.gmra.mxu0 %v1155
  %v1333 = vpop.f32.mrf.mxu0
  %v1334 = vadd.f32 0.0, %v1333
  %v1335 = vpop.f32.mrf.mxu0
  %v1336 = vadd.f32 0.0, %v1335
  %1337 = vmatmul.bf16.gmra.mxu0 %v1157
  %v1338 = vpop.f32.mrf.mxu0
  %v1339 = vadd.f32 0.0, %v1338
  %v1340 = vpop.f32.mrf.mxu0
  %v1341 = vadd.f32 0.0, %v1340
  %1342 = vmatmul.bf16.gmra.mxu0 %v1159
  %v1343 = vpop.f32.mrf.mxu0
  %v1344 = vadd.f32 0.0, %v1343
  %v1345 = vpop.f32.mrf.mxu0
  %v1346 = vadd.f32 0.0, %v1345
  %1347 = vmatmul.bf16.gmra.mxu0 %v1161
  %v1348 = vpop.f32.mrf.mxu0
  %v1349 = vadd.f32 0.0, %v1348
  %v1350 = vpop.f32.mrf.mxu0
  %v1351 = vadd.f32 0.0, %v1350
  %1352 = vmatmul.bf16.gmra.mxu0 %v1163
  %v1353 = vpop.f32.mrf.mxu0
  %v1354 = vadd.f32 0.0, %v1353
  %v1355 = vpop.f32.mrf.mxu0
  %v1356 = vadd.f32 0.0, %v1355
  %1357 = vmatmul.bf16.gmra.mxu0 %v1165
  %v1358 = vpop.f32.mrf.mxu0
  %v1359 = vadd.f32 0.0, %v1358
  %v1360 = vpop.f32.mrf.mxu0
  %v1361 = vadd.f32 0.0, %v1360
  %1362 = vmatmul.bf16.gmra.mxu0 %v1167
  %v1363 = vpop.f32.mrf.mxu0
  %v1364 = vadd.f32 0.0, %v1363
  %v1365 = vpop.f32.mrf.mxu0
  %v1366 = vadd.f32 0.0, %v1365
  %1367 = vmatmul.bf16.gmra.mxu0 %v1169
  %v1368 = vpop.f32.mrf.mxu0
  %v1369 = vadd.f32 0.0, %v1368
  %v1370 = vpop.f32.mrf.mxu0
  %v1371 = vadd.f32 0.0, %v1370
  %1372 = vmatmul.bf16.gmra.mxu0 %v1171
  %v1373 = vpop.f32.mrf.mxu0
  %v1374 = vadd.f32 0.0, %v1373
  %v1375 = vpop.f32.mrf.mxu0
  %v1376 = vadd.f32 0.0, %v1375
  %1377 = vmatmul.bf16.gmra.mxu0 %v1173
  %v1378 = vpop.f32.mrf.mxu0
  %v1379 = vadd.f32 0.0, %v1378
  %v1380 = vpop.f32.mrf.mxu0
  %v1381 = vadd.f32 0.0, %v1380
  %1382 = vmatmul.bf16.gmra.mxu0 %v1175
  %v1383 = vpop.f32.mrf.mxu0
  %v1384 = vadd.f32 0.0, %v1383
  %v1385 = vpop.f32.mrf.mxu0
  %v1386 = vadd.f32 0.0, %v1385
  %1387 = vmatmul.bf16.gmra.mxu0 %v1177
  %v1388 = vpop.f32.mrf.mxu0
  %v1389 = vadd.f32 0.0, %v1388
  %v1390 = vpop.f32.mrf.mxu0
  %v1391 = vadd.f32 0.0, %v1390
  %1392 = vmatmul.bf16.gmra.mxu0 %v1179
  %v1393 = vpop.f32.mrf.mxu0
  %v1394 = vadd.f32 0.0, %v1393
  %v1395 = vpop.f32.mrf.mxu0
  %v1396 = vadd.f32 0.0, %v1395
  %1397 = vmatmul.bf16.gmra.mxu0 %v1181
  %v1398 = vpop.f32.mrf.mxu0
  %v1399 = vadd.f32 0.0, %v1398
  %v1400 = vpop.f32.mrf.mxu0
  %v1401 = vadd.f32 0.0, %v1400
  %1402 = vmatmul.bf16.gmra.mxu0 %v1183
  %v1403 = vpop.f32.mrf.mxu0
  %v1404 = vadd.f32 0.0, %v1403
  %v1405 = vpop.f32.mrf.mxu0
  %v1406 = vadd.f32 0.0, %v1405
  %1407 = vmatmul.bf16.gmra.mxu0 %v1185
  %v1408 = vpop.f32.mrf.mxu0
  %v1409 = vadd.f32 0.0, %v1408
  %v1410 = vpop.f32.mrf.mxu0
  %v1411 = vadd.f32 0.0, %v1410
  %1412 = vdwg.mxu0
  %1413 = vmatpush.bf16.msra.mxu0 0
  %1414 = vmatpush.bf16.msra.mxu0 0
  %1415 = vmatpush.bf16.msra.mxu0 %v946
  %1416 = vmatpush.bf16.msra.mxu0 %v945
  %1417 = vmatpush.bf16.msra.mxu0 %v944
  %1418 = vmatpush.bf16.msra.mxu0 %v943
  %1419 = vmatpush.bf16.msra.mxu0 %v942
  %1420 = vmatpush.bf16.msra.mxu0 %v941
  %1421 = vmatmul.bf16.gmra.mxu0 %v1213
  %v1422 = vpop.f32.mrf.mxu0
  %v1423 = vadd.f32 %v1294, %v1422
  %v1424 = vpop.f32.mrf.mxu0
  %v1425 = vadd.f32 %v1296, %v1424
  %1426 = vmatmul.bf16.gmra.mxu0 %v1216
  %v1427 = vpop.f32.mrf.mxu0
  %v1428 = vadd.f32 %v1299, %v1427
  %v1429 = vpop.f32.mrf.mxu0
  %v1430 = vadd.f32 %v1301, %v1429
  %1431 = vmatmul.bf16.gmra.mxu0 %v1219
  %v1432 = vpop.f32.mrf.mxu0
  %v1433 = vadd.f32 %v1304, %v1432
  %v1434 = vpop.f32.mrf.mxu0
  %v1435 = vadd.f32 %v1306, %v1434
  %1436 = vmatmul.bf16.gmra.mxu0 %v1222
  %v1437 = vpop.f32.mrf.mxu0
  %v1438 = vadd.f32 %v1309, %v1437
  %v1439 = vpop.f32.mrf.mxu0
  %v1440 = vadd.f32 %v1311, %v1439
  %1441 = vmatmul.bf16.gmra.mxu0 %v1225
  %v1442 = vpop.f32.mrf.mxu0
  %v1443 = vadd.f32 %v1314, %v1442
  %v1444 = vpop.f32.mrf.mxu0
  %v1445 = vadd.f32 %v1316, %v1444
  %1446 = vmatmul.bf16.gmra.mxu0 %v1228
  %v1447 = vpop.f32.mrf.mxu0
  %v1448 = vadd.f32 %v1319, %v1447
  %v1449 = vpop.f32.mrf.mxu0
  %v1450 = vadd.f32 %v1321, %v1449
  %1451 = vmatmul.bf16.gmra.mxu0 %v1231
  %v1452 = vpop.f32.mrf.mxu0
  %v1453 = vadd.f32 %v1324, %v1452
  %v1454 = vpop.f32.mrf.mxu0
  %v1455 = vadd.f32 %v1326, %v1454
  %1456 = vmatmul.bf16.gmra.mxu0 %v1234
  %v1457 = vpop.f32.mrf.mxu0
  %v1458 = vadd.f32 %v1329, %v1457
  %v1459 = vpop.f32.mrf.mxu0
  %v1460 = vadd.f32 %v1331, %v1459
  %1461 = vmatmul.bf16.gmra.mxu0 %v1237
  %v1462 = vpop.f32.mrf.mxu0
  %v1463 = vadd.f32 %v1334, %v1462
  %v1464 = vpop.f32.mrf.mxu0
  %v1465 = vadd.f32 %v1336, %v1464
  %1466 = vmatmul.bf16.gmra.mxu0 %v1240
  %v1467 = vpop.f32.mrf.mxu0
  %v1468 = vadd.f32 %v1339, %v1467
  %v1469 = vpop.f32.mrf.mxu0
  %v1470 = vadd.f32 %v1341, %v1469
  %1471 = vmatmul.bf16.gmra.mxu0 %v1243
  %v1472 = vpop.f32.mrf.mxu0
  %v1473 = vadd.f32 %v1344, %v1472
  %v1474 = vpop.f32.mrf.mxu0
  %v1475 = vadd.f32 %v1346, %v1474
  %1476 = vmatmul.bf16.gmra.mxu0 %v1246
  %v1477 = vpop.f32.mrf.mxu0
  %v1478 = vadd.f32 %v1349, %v1477
  %v1479 = vpop.f32.mrf.mxu0
  %v1480 = vadd.f32 %v1351, %v1479
  %1481 = vmatmul.bf16.gmra.mxu0 %v1249
  %v1482 = vpop.f32.mrf.mxu0
  %v1483 = vadd.f32 %v1354, %v1482
  %v1484 = vpop.f32.mrf.mxu0
  %v1485 = vadd.f32 %v1356, %v1484
  %1486 = vmatmul.bf16.gmra.mxu0 %v1252
  %v1487 = vpop.f32.mrf.mxu0
  %v1488 = vadd.f32 %v1359, %v1487
  %v1489 = vpop.f32.mrf.mxu0
  %v1490 = vadd.f32 %v1361, %v1489
  %1491 = vmatmul.bf16.gmra.mxu0 %v1255
  %v1492 = vpop.f32.mrf.mxu0
  %v1493 = vadd.f32 %v1364, %v1492
  %v1494 = vpop.f32.mrf.mxu0
  %v1495 = vadd.f32 %v1366, %v1494
  %1496 = vmatmul.bf16.gmra.mxu0 %v1258
  %v1497 = vpop.f32.mrf.mxu0
  %v1498 = vadd.f32 %v1369, %v1497
  %v1499 = vpop.f32.mrf.mxu0
  %v1500 = vadd.f32 %v1371, %v1499
  %1501 = vmatmul.bf16.gmra.mxu0 %v1261
  %v1502 = vpop.f32.mrf.mxu0
  %v1503 = vadd.f32 %v1374, %v1502
  %v1504 = vpop.f32.mrf.mxu0
  %v1505 = vadd.f32 %v1376, %v1504
  %1506 = vmatmul.bf16.gmra.mxu0 %v1264
  %v1507 = vpop.f32.mrf.mxu0
  %v1508 = vadd.f32 %v1379, %v1507
  %v1509 = vpop.f32.mrf.mxu0
  %v1510 = vadd.f32 %v1381, %v1509
  %1511 = vmatmul.bf16.gmra.mxu0 %v1267
  %v1512 = vpop.f32.mrf.mxu0
  %v1513 = vadd.f32 %v1384, %v1512
  %v1514 = vpop.f32.mrf.mxu0
  %v1515 = vadd.f32 %v1386, %v1514
  %1516 = vmatmul.bf16.gmra.mxu0 %v1270
  %v1517 = vpop.f32.mrf.mxu0
  %v1518 = vadd.f32 %v1389, %v1517
  %v1519 = vpop.f32.mrf.mxu0
  %v1520 = vadd.f32 %v1391, %v1519
  %1521 = vmatmul.bf16.gmra.mxu0 %v1273
  %v1522 = vpop.f32.mrf.mxu0
  %v1523 = vadd.f32 %v1394, %v1522
  %v1524 = vpop.f32.mrf.mxu0
  %v1525 = vadd.f32 %v1396, %v1524
  %1526 = vmatmul.bf16.gmra.mxu0 %v1276
  %v1527 = vpop.f32.mrf.mxu0
  %v1528 = vadd.f32 %v1399, %v1527
  %v1529 = vpop.f32.mrf.mxu0
  %v1530 = vadd.f32 %v1401, %v1529
  %1531 = vmatmul.bf16.gmra.mxu0 %v1279
  %v1532 = vpop.f32.mrf.mxu0
  %v1533 = vadd.f32 %v1404, %v1532
  %v1534 = vpop.f32.mrf.mxu0
  %v1535 = vadd.f32 %v1406, %v1534
  %1536 = vmatmul.bf16.gmra.mxu0 %v1282
  %v1537 = vpop.f32.mrf.mxu0
  %v1538 = vadd.f32 %v1409, %v1537
  %v1539 = vpop.f32.mrf.mxu0
  %v1540 = vadd.f32 %v1411, %v1539
  %1541 = vdwg.mxu0
  %v1542 = vmax.f32 %v1423, %v1433
  %v1543 = vmax.f32 %v1425, %v1435
  %v1544 = vmax.f32 %v1428, %v1438
  %v1545 = vmax.f32 %v1430, %v1440
  %v1546 = vmax.f32 %v1443, %v1453
  %v1547 = vmax.f32 %v1445, %v1455
  %v1548 = vmax.f32 %v1448, %v1458
  %v1549 = vmax.f32 %v1450, %v1460
  %v1550 = vmax.f32 %v1463, %v1473
  %v1551 = vmax.f32 %v1465, %v1475
  %v1552 = vmax.f32 %v1468, %v1478
  %v1553 = vmax.f32 %v1470, %v1480
  %v1554 = vmax.f32 %v1483, %v1493
  %v1555 = vmax.f32 %v1485, %v1495
  %v1556 = vmax.f32 %v1488, %v1498
  %v1557 = vmax.f32 %v1490, %v1500
  %v1558 = vmax.f32 %v1503, %v1513
  %v1559 = vmax.f32 %v1505, %v1515
  %v1560 = vmax.f32 %v1508, %v1518
  %v1561 = vmax.f32 %v1510, %v1520
  %v1562 = vmax.f32 %v1523, %v1533
  %v1563 = vmax.f32 %v1525, %v1535
  %v1564 = vmax.f32 %v1528, %v1538
  %v1565 = vmax.f32 %v1530, %v1540
  %v1566 = vld [vmem:[%s4] sm:$0xff]
  %v1567 = vld [vmem:[%s4 + $0x8] sm:$0xff]
  %v1568 = vld [vmem:[%s4 + $0x10] sm:$0xff]
  %v1569 = vld [vmem:[%s4 + $0x18] sm:$0xff]
  %1571 = vset.pattern.permute.xlu0 0
  %1572 = vperm.xlu0 %1571, %v1566
  %v1573 = vpop.permute.xlu0 %1572
  %1576 = vset.pattern.permute.xlu0 0
  %1577 = vperm.xlu0 %1576, %v1567
  %v1578 = vpop.permute.xlu0 %1577
  %1581 = vset.pattern.permute.xlu0 0
  %1582 = vperm.xlu0 %1581, %v1568
  %v1583 = vpop.permute.xlu0 %1582
  %1586 = vset.pattern.permute.xlu0 0
  %1587 = vperm.xlu0 %1586, %v1569
  %v1588 = vpop.permute.xlu0 %1587
  %v1590 = vadd.f32 %v1542, %v1573
  %v1591 = vadd.f32 %v1543, %v1578
  %v1592 = vadd.f32 %v1544, %v1583
  %v1593 = vadd.f32 %v1545, %v1588
  %v1594 = vadd.f32 %v1546, %v1573
  %v1595 = vadd.f32 %v1547, %v1578
  %v1596 = vadd.f32 %v1548, %v1583
  %v1597 = vadd.f32 %v1549, %v1588
  %v1598 = vadd.f32 %v1550, %v1573
  %v1599 = vadd.f32 %v1551, %v1578
  %v1600 = vadd.f32 %v1552, %v1583
  %v1601 = vadd.f32 %v1553, %v1588
  %v1602 = vadd.f32 %v1554, %v1573
  %v1603 = vadd.f32 %v1555, %v1578
  %v1604 = vadd.f32 %v1556, %v1583
  %v1605 = vadd.f32 %v1557, %v1588
  %v1606 = vadd.f32 %v1558, %v1573
  %v1607 = vadd.f32 %v1559, %v1578
  %v1608 = vadd.f32 %v1560, %v1583
  %v1609 = vadd.f32 %v1561, %v1588
  %v1610 = vadd.f32 %v1562, %v1573
  %v1611 = vadd.f32 %v1563, %v1578
  %v1612 = vadd.f32 %v1564, %v1583
  %v1613 = vadd.f32 %v1565, %v1588
  %v1614 = vmax.f32 %v1590, 0.0
  %v1615 = vmax.f32 %v1591, 0.0
  %v1616 = vmax.f32 %v1592, 0.0
  %v1617 = vmax.f32 %v1593, 0.0
  %v1618 = vmax.f32 %v1594, 0.0
  %v1619 = vmax.f32 %v1595, 0.0
  %v1620 = vmax.f32 %v1596, 0.0
  %v1621 = vmax.f32 %v1597, 0.0
  %v1622 = vmax.f32 %v1598, 0.0
  %v1623 = vmax.f32 %v1599, 0.0
  %v1624 = vmax.f32 %v1600, 0.0
  %v1625 = vmax.f32 %v1601, 0.0
  %v1626 = vmax.f32 %v1602, 0.0
  %v1627 = vmax.f32 %v1603, 0.0
  %v1628 = vmax.f32 %v1604, 0.0
  %v1629 = vmax.f32 %v1605, 0.0
  %v1630 = vmax.f32 %v1606, 0.0
  %v1631 = vmax.f32 %v1607, 0.0
  %v1632 = vmax.f32 %v1608, 0.0
  %v1633 = vmax.f32 %v1609, 0.0
  %v1634 = vmax.f32 %v1610, 0.0
  %v1635 = vmax.f32 %v1611, 0.0
  %v1636 = vmax.f32 %v1612, 0.0
  %v1637 = vmax.f32 %v1613, 0.0
  %v1638 = vpack.c.bf16 %v1615, %v1614
  %v1639 = vpack.c.bf16 %v1617, %v1616
  %v1640 = vpack.c.bf16 %v1619, %v1618
  %v1641 = vpack.c.bf16 %v1621, %v1620
  %v1642 = vpack.c.bf16 %v1623, %v1622
  %v1643 = vpack.c.bf16 %v1625, %v1624
  %v1644 = vpack.c.bf16 %v1627, %v1626
  %v1645 = vpack.c.bf16 %v1629, %v1628
  %v1646 = vpack.c.bf16 %v1631, %v1630
  %v1647 = vpack.c.bf16 %v1633, %v1632
  %v1648 = vpack.c.bf16 %v1635, %v1634
  %v1649 = vpack.c.bf16 %v1637, %v1636
  %v1650 = vld [vmem:[%s5] sm:$0xff]
  %v1651 = vld [vmem:[%s5 + $0x8] sm:$0xff]
  %v1652 = vld [vmem:[%s5 + $0x10] sm:$0xff]
  %v1653 = vld [vmem:[%s5 + $0x18] sm:$0xff]
  %v1654 = vld [vmem:[%s5 + $0x20] sm:$0xff]
  %v1655 = vld [vmem:[%s5 + $0x28] sm:$0xff]
  %v1656 = vld [vmem:[%s5 + $0x30] sm:$0xff]
  %v1657 = vld [vmem:[%s5 + $0x38] sm:$0xff]
  %v1658 = vld [vmem:[%s5 + $0x40] sm:$0xff]
  %v1659 = vld [vmem:[%s5 + $0x48] sm:$0xff]
  %v1660 = vld [vmem:[%s5 + $0x50] sm:$0xff]
  %v1661 = vld [vmem:[%s5 + $0x58] sm:$0xff]
  %v1662 = vld [vmem:[%s5 + $0x60] sm:$0xff]
  %v1663 = vld [vmem:[%s5 + $0x68] sm:$0xff]
  %v1664 = vld [vmem:[%s5 + $0x70] sm:$0xff]
  %v1665 = vld [vmem:[%s5 + $0x78] sm:$0xff]
  %v1666 = vld [vmem:[%s5 + $0x80] sm:$0xff]
  %v1667 = vld [vmem:[%s5 + $0x88] sm:$0xff]
  %v1668 = vld [vmem:[%s5 + $0x90] sm:$0xff]
  %v1669 = vld [vmem:[%s5 + $0x98] sm:$0xff]
  %v1670 = vld [vmem:[%s5 + $0xa0] sm:$0xff]
  %v1671 = vld [vmem:[%s5 + $0xa8] sm:$0xff]
  %v1672 = vld [vmem:[%s5 + $0xb0] sm:$0xff]
  %v1673 = vld [vmem:[%s5 + $0xb8] sm:$0xff]
  %v1674 = vld [vmem:[%s6] sm:$0xff]
  %v1675 = vld [vmem:[%s6 + $0x8] sm:$0xff]
  %v1676 = vld [vmem:[%s6 + $0x10] sm:$0xff]
  %v1677 = vld [vmem:[%s6 + $0x18] sm:$0xff]
  %v1678 = vld [vmem:[%s6 + $0x20] sm:$0xff]
  %v1679 = vld [vmem:[%s6 + $0x28] sm:$0xff]
  %v1680 = vld [vmem:[%s6 + $0x30] sm:$0xff]
  %v1681 = vld [vmem:[%s6 + $0x38] sm:$0xff]
  %v1682 = vld [vmem:[%s6 + $0x40] sm:$0xff]
  %v1683 = vld [vmem:[%s6 + $0x48] sm:$0xff]
  %v1684 = vld [vmem:[%s6 + $0x50] sm:$0xff]
  %v1685 = vld [vmem:[%s6 + $0x58] sm:$0xff]
  %v1686 = vld [vmem:[%s6 + $0x60] sm:$0xff]
  %v1687 = vld [vmem:[%s6 + $0x68] sm:$0xff]
  %v1688 = vld [vmem:[%s6 + $0x70] sm:$0xff]
  %v1689 = vld [vmem:[%s6 + $0x78] sm:$0xff]
  %v1690 = vld [vmem:[%s6 + $0x80] sm:$0xff]
  %v1691 = vld [vmem:[%s6 + $0x88] sm:$0xff]
  %v1692 = vld [vmem:[%s6 + $0x90] sm:$0xff]
  %v1693 = vld [vmem:[%s6 + $0x98] sm:$0xff]
  %v1694 = vld [vmem:[%s6 + $0xa0] sm:$0xff]
  %v1695 = vld [vmem:[%s6 + $0xa8] sm:$0xff]
  %v1696 = vld [vmem:[%s6 + $0xb0] sm:$0xff]
  %v1697 = vld [vmem:[%s6 + $0xb8] sm:$0xff]
  %1699 = vset.pattern.permute.xlu0 0
  %1700 = vperm.xlu0 %1699, %v1674
  %v1701 = vpop.permute.xlu0 %1700
  %1704 = vset.pattern.permute.xlu0 0
  %1705 = vperm.xlu0 %1704, %v1675
  %v1706 = vpop.permute.xlu0 %1705
  %1709 = vset.pattern.permute.xlu0 0
  %1710 = vperm.xlu0 %1709, %v1676
  %v1711 = vpop.permute.xlu0 %1710
  %1714 = vset.pattern.permute.xlu0 0
  %1715 = vperm.xlu0 %1714, %v1677
  %v1716 = vpop.permute.xlu0 %1715
  %1719 = vset.pattern.permute.xlu0 0
  %1720 = vperm.xlu0 %1719, %v1678
  %v1721 = vpop.permute.xlu0 %1720
  %1724 = vset.pattern.permute.xlu0 0
  %1725 = vperm.xlu0 %1724, %v1679
  %v1726 = vpop.permute.xlu0 %1725
  %1729 = vset.pattern.permute.xlu0 0
  %1730 = vperm.xlu0 %1729, %v1680
  %v1731 = vpop.permute.xlu0 %1730
  %1734 = vset.pattern.permute.xlu0 0
  %1735 = vperm.xlu0 %1734, %v1681
  %v1736 = vpop.permute.xlu0 %1735
  %1739 = vset.pattern.permute.xlu0 0
  %1740 = vperm.xlu0 %1739, %v1682
  %v1741 = vpop.permute.xlu0 %1740
  %1744 = vset.pattern.permute.xlu0 0
  %1745 = vperm.xlu0 %1744, %v1683
  %v1746 = vpop.permute.xlu0 %1745
  %1749 = vset.pattern.permute.xlu0 0
  %1750 = vperm.xlu0 %1749, %v1684
  %v1751 = vpop.permute.xlu0 %1750
  %1754 = vset.pattern.permute.xlu0 0
  %1755 = vperm.xlu0 %1754, %v1685
  %v1756 = vpop.permute.xlu0 %1755
  %1759 = vset.pattern.permute.xlu0 0
  %1760 = vperm.xlu0 %1759, %v1686
  %v1761 = vpop.permute.xlu0 %1760
  %1764 = vset.pattern.permute.xlu0 0
  %1765 = vperm.xlu0 %1764, %v1687
  %v1766 = vpop.permute.xlu0 %1765
  %1769 = vset.pattern.permute.xlu0 0
  %1770 = vperm.xlu0 %1769, %v1688
  %v1771 = vpop.permute.xlu0 %1770
  %1774 = vset.pattern.permute.xlu0 0
  %1775 = vperm.xlu0 %1774, %v1689
  %v1776 = vpop.permute.xlu0 %1775
  %1779 = vset.pattern.permute.xlu0 0
  %1780 = vperm.xlu0 %1779, %v1690
  %v1781 = vpop.permute.xlu0 %1780
  %1784 = vset.pattern.permute.xlu0 0
  %1785 = vperm.xlu0 %1784, %v1691
  %v1786 = vpop.permute.xlu0 %1785
  %1789 = vset.pattern.permute.xlu0 0
  %1790 = vperm.xlu0 %1789, %v1692
  %v1791 = vpop.permute.xlu0 %1790
  %1794 = vset.pattern.permute.xlu0 0
  %1795 = vperm.xlu0 %1794, %v1693
  %v1796 = vpop.permute.xlu0 %1795
  %1799 = vset.pattern.permute.xlu0 0
  %1800 = vperm.xlu0 %1799, %v1694
  %v1801 = vpop.permute.xlu0 %1800
  %1804 = vset.pattern.permute.xlu0 0
  %1805 = vperm.xlu0 %1804, %v1695
  %v1806 = vpop.permute.xlu0 %1805
  %1809 = vset.pattern.permute.xlu0 0
  %1810 = vperm.xlu0 %1809, %v1696
  %v1811 = vpop.permute.xlu0 %1810
  %1814 = vset.pattern.permute.xlu0 0
  %1815 = vperm.xlu0 %1814, %v1697
  %v1816 = vpop.permute.xlu0 %1815
  %v1842 = vunpack.c.l.b16 %v1650
  %v1843 = vunpack.c.h.b16 %v1650
  %v1844 = vunpack.c.l.b16 %v1651
  %v1845 = vunpack.c.h.b16 %v1651
  %v1846 = vunpack.c.l.b16 %v1652
  %v1847 = vunpack.c.h.b16 %v1652
  %v1848 = vunpack.c.l.b16 %v1653
  %v1849 = vunpack.c.h.b16 %v1653
  %v1850 = vunpack.c.l.b16 %v1654
  %v1851 = vunpack.c.h.b16 %v1654
  %v1852 = vunpack.c.l.b16 %v1655
  %v1853 = vunpack.c.h.b16 %v1655
  %v1854 = vunpack.c.l.b16 %v1656
  %v1855 = vunpack.c.h.b16 %v1656
  %v1856 = vunpack.c.l.b16 %v1657
  %v1857 = vunpack.c.h.b16 %v1657
  %v1858 = vunpack.c.l.b16 %v1658
  %v1859 = vunpack.c.h.b16 %v1658
  %v1860 = vunpack.c.l.b16 %v1659
  %v1861 = vunpack.c.h.b16 %v1659
  %v1862 = vunpack.c.l.b16 %v1660
  %v1863 = vunpack.c.h.b16 %v1660
  %v1864 = vunpack.c.l.b16 %v1661
  %v1865 = vunpack.c.h.b16 %v1661
  %v1866 = vunpack.c.l.b16 %v1662
  %v1867 = vunpack.c.h.b16 %v1662
  %v1868 = vunpack.c.l.b16 %v1663
  %v1869 = vunpack.c.h.b16 %v1663
  %v1870 = vunpack.c.l.b16 %v1664
  %v1871 = vunpack.c.h.b16 %v1664
  %v1872 = vunpack.c.l.b16 %v1665
  %v1873 = vunpack.c.h.b16 %v1665
  %v1874 = vunpack.c.l.b16 %v1666
  %v1875 = vunpack.c.h.b16 %v1666
  %v1876 = vunpack.c.l.b16 %v1667
  %v1877 = vunpack.c.h.b16 %v1667
  %v1878 = vunpack.c.l.b16 %v1668
  %v1879 = vunpack.c.h.b16 %v1668
  %v1880 = vunpack.c.l.b16 %v1669
  %v1881 = vunpack.c.h.b16 %v1669
  %v1882 = vunpack.c.l.b16 %v1670
  %v1883 = vunpack.c.h.b16 %v1670
  %v1884 = vunpack.c.l.b16 %v1671
  %v1885 = vunpack.c.h.b16 %v1671
  %v1886 = vunpack.c.l.b16 %v1672
  %v1887 = vunpack.c.h.b16 %v1672
  %v1888 = vunpack.c.l.b16 %v1673
  %v1889 = vunpack.c.h.b16 %v1673
  %v1890 = vpack.c.b16 %v1844, %v1842
  %v1891 = vpack.c.b16 %v1845, %v1843
  %v1892 = vpack.c.b16 %v1848, %v1846
  %v1893 = vpack.c.b16 %v1849, %v1847
  %v1894 = vpack.c.b16 %v1852, %v1850
  %v1895 = vpack.c.b16 %v1853, %v1851
  %v1896 = vpack.c.b16 %v1856, %v1854
  %v1897 = vpack.c.b16 %v1857, %v1855
  %v1898 = vpack.c.b16 %v1860, %v1858
  %v1899 = vpack.c.b16 %v1861, %v1859
  %v1900 = vpack.c.b16 %v1864, %v1862
  %v1901 = vpack.c.b16 %v1865, %v1863
  %v1902 = vpack.c.b16 %v1868, %v1866
  %v1903 = vpack.c.b16 %v1869, %v1867
  %v1904 = vpack.c.b16 %v1872, %v1870
  %v1905 = vpack.c.b16 %v1873, %v1871
  %v1906 = vpack.c.b16 %v1876, %v1874
  %v1907 = vpack.c.b16 %v1877, %v1875
  %v1908 = vpack.c.b16 %v1880, %v1878
  %v1909 = vpack.c.b16 %v1881, %v1879
  %v1910 = vpack.c.b16 %v1884, %v1882
  %v1911 = vpack.c.b16 %v1885, %v1883
  %v1912 = vpack.c.b16 %v1888, %v1886
  %v1913 = vpack.c.b16 %v1889, %v1887
  %vm1926 = vcmask 523264
  %v1928 = vsel %vm1926, %v1891, 0
  %v1931 = vsel %vm1926, %v1893, 0
  %v1934 = vsel %vm1926, %v1895, 0
  %v1937 = vsel %vm1926, %v1897, 0
  %v1940 = vsel %vm1926, %v1899, 0
  %v1943 = vsel %vm1926, %v1901, 0
  %v1946 = vsel %vm1926, %v1903, 0
  %v1949 = vsel %vm1926, %v1905, 0
  %v1952 = vsel %vm1926, %v1907, 0
  %v1955 = vsel %vm1926, %v1909, 0
  %v1958 = vsel %vm1926, %v1911, 0
  %v1961 = vsel %vm1926, %v1913, 0
  %1963 = vmatpush.bf16.msra.mxu0 %v1645
  %1964 = vmatpush.bf16.msra.mxu0 %v1644
  %1965 = vmatpush.bf16.msra.mxu0 %v1643
  %1966 = vmatpush.bf16.msra.mxu0 %v1642
  %1967 = vmatpush.bf16.msra.mxu0 %v1641
  %1968 = vmatpush.bf16.msra.mxu0 %v1640
  %1969 = vmatpush.bf16.msra.mxu0 %v1639
  %1970 = vmatpush.bf16.msra.mxu0 %v1638
  %1971 = vmatmul.bf16.gmra.mxu0 %v1890
  %v1972 = vpop.f32.mrf.mxu0
  %v1973 = vadd.f32 %v1701, %v1972
  %v1974 = vpop.f32.mrf.mxu0
  %v1975 = vadd.f32 %v1706, %v1974
  %1976 = vmatmul.bf16.gmra.mxu0 %v1892
  %v1977 = vpop.f32.mrf.mxu0
  %v1978 = vadd.f32 %v1711, %v1977
  %v1979 = vpop.f32.mrf.mxu0
  %v1980 = vadd.f32 %v1716, %v1979
  %1981 = vmatmul.bf16.gmra.mxu0 %v1894
  %v1982 = vpop.f32.mrf.mxu0
  %v1983 = vadd.f32 %v1721, %v1982
  %v1984 = vpop.f32.mrf.mxu0
  %v1985 = vadd.f32 %v1726, %v1984
  %1986 = vmatmul.bf16.gmra.mxu0 %v1896
  %v1987 = vpop.f32.mrf.mxu0
  %v1988 = vadd.f32 %v1731, %v1987
  %v1989 = vpop.f32.mrf.mxu0
  %v1990 = vadd.f32 %v1736, %v1989
  %1991 = vmatmul.bf16.gmra.mxu0 %v1898
  %v1992 = vpop.f32.mrf.mxu0
  %v1993 = vadd.f32 %v1741, %v1992
  %v1994 = vpop.f32.mrf.mxu0
  %v1995 = vadd.f32 %v1746, %v1994
  %1996 = vmatmul.bf16.gmra.mxu0 %v1900
  %v1997 = vpop.f32.mrf.mxu0
  %v1998 = vadd.f32 %v1751, %v1997
  %v1999 = vpop.f32.mrf.mxu0
  %v2000 = vadd.f32 %v1756, %v1999
  %2001 = vmatmul.bf16.gmra.mxu0 %v1902
  %v2002 = vpop.f32.mrf.mxu0
  %v2003 = vadd.f32 %v1761, %v2002
  %v2004 = vpop.f32.mrf.mxu0
  %v2005 = vadd.f32 %v1766, %v2004
  %2006 = vmatmul.bf16.gmra.mxu0 %v1904
  %v2007 = vpop.f32.mrf.mxu0
  %v2008 = vadd.f32 %v1771, %v2007
  %v2009 = vpop.f32.mrf.mxu0
  %v2010 = vadd.f32 %v1776, %v2009
  %2011 = vmatmul.bf16.gmra.mxu0 %v1906
  %v2012 = vpop.f32.mrf.mxu0
  %v2013 = vadd.f32 %v1781, %v2012
  %v2014 = vpop.f32.mrf.mxu0
  %v2015 = vadd.f32 %v1786, %v2014
  %2016 = vmatmul.bf16.gmra.mxu0 %v1908
  %v2017 = vpop.f32.mrf.mxu0
  %v2018 = vadd.f32 %v1791, %v2017
  %v2019 = vpop.f32.mrf.mxu0
  %v2020 = vadd.f32 %v1796, %v2019
  %2021 = vmatmul.bf16.gmra.mxu0 %v1910
  %v2022 = vpop.f32.mrf.mxu0
  %v2023 = vadd.f32 %v1801, %v2022
  %v2024 = vpop.f32.mrf.mxu0
  %v2025 = vadd.f32 %v1806, %v2024
  %2026 = vmatmul.bf16.gmra.mxu0 %v1912
  %v2027 = vpop.f32.mrf.mxu0
  %v2028 = vadd.f32 %v1811, %v2027
  %v2029 = vpop.f32.mrf.mxu0
  %v2030 = vadd.f32 %v1816, %v2029
  %2031 = vdwg.mxu0
  %2032 = vmatpush.bf16.msra.mxu0 0
  %2033 = vmatpush.bf16.msra.mxu0 0
  %2034 = vmatpush.bf16.msra.mxu0 0
  %2035 = vmatpush.bf16.msra.mxu0 0
  %2036 = vmatpush.bf16.msra.mxu0 %v1649
  %2037 = vmatpush.bf16.msra.mxu0 %v1648
  %2038 = vmatpush.bf16.msra.mxu0 %v1647
  %2039 = vmatpush.bf16.msra.mxu0 %v1646
  %2040 = vmatmul.bf16.gmra.mxu0 %v1928
  %v2041 = vpop.f32.mrf.mxu0
  %v2042 = vadd.f32 %v1973, %v2041
  %v2043 = vpop.f32.mrf.mxu0
  %v2044 = vadd.f32 %v1975, %v2043
  %2045 = vmatmul.bf16.gmra.mxu0 %v1931
  %v2046 = vpop.f32.mrf.mxu0
  %v2047 = vadd.f32 %v1978, %v2046
  %v2048 = vpop.f32.mrf.mxu0
  %v2049 = vadd.f32 %v1980, %v2048
  %2050 = vmatmul.bf16.gmra.mxu0 %v1934
  %v2051 = vpop.f32.mrf.mxu0
  %v2052 = vadd.f32 %v1983, %v2051
  %v2053 = vpop.f32.mrf.mxu0
  %v2054 = vadd.f32 %v1985, %v2053
  %2055 = vmatmul.bf16.gmra.mxu0 %v1937
  %v2056 = vpop.f32.mrf.mxu0
  %v2057 = vadd.f32 %v1988, %v2056
  %v2058 = vpop.f32.mrf.mxu0
  %v2059 = vadd.f32 %v1990, %v2058
  %2060 = vmatmul.bf16.gmra.mxu0 %v1940
  %v2061 = vpop.f32.mrf.mxu0
  %v2062 = vadd.f32 %v1993, %v2061
  %v2063 = vpop.f32.mrf.mxu0
  %v2064 = vadd.f32 %v1995, %v2063
  %2065 = vmatmul.bf16.gmra.mxu0 %v1943
  %v2066 = vpop.f32.mrf.mxu0
  %v2067 = vadd.f32 %v1998, %v2066
  %v2068 = vpop.f32.mrf.mxu0
  %v2069 = vadd.f32 %v2000, %v2068
  %2070 = vmatmul.bf16.gmra.mxu0 %v1946
  %v2071 = vpop.f32.mrf.mxu0
  %v2072 = vadd.f32 %v2003, %v2071
  %v2073 = vpop.f32.mrf.mxu0
  %v2074 = vadd.f32 %v2005, %v2073
  %2075 = vmatmul.bf16.gmra.mxu0 %v1949
  %v2076 = vpop.f32.mrf.mxu0
  %v2077 = vadd.f32 %v2008, %v2076
  %v2078 = vpop.f32.mrf.mxu0
  %v2079 = vadd.f32 %v2010, %v2078
  %2080 = vmatmul.bf16.gmra.mxu0 %v1952
  %v2081 = vpop.f32.mrf.mxu0
  %v2082 = vadd.f32 %v2013, %v2081
  %v2083 = vpop.f32.mrf.mxu0
  %v2084 = vadd.f32 %v2015, %v2083
  %2085 = vmatmul.bf16.gmra.mxu0 %v1955
  %v2086 = vpop.f32.mrf.mxu0
  %v2087 = vadd.f32 %v2018, %v2086
  %v2088 = vpop.f32.mrf.mxu0
  %v2089 = vadd.f32 %v2020, %v2088
  %2090 = vmatmul.bf16.gmra.mxu0 %v1958
  %v2091 = vpop.f32.mrf.mxu0
  %v2092 = vadd.f32 %v2023, %v2091
  %v2093 = vpop.f32.mrf.mxu0
  %v2094 = vadd.f32 %v2025, %v2093
  %2095 = vmatmul.bf16.gmra.mxu0 %v1961
  %v2096 = vpop.f32.mrf.mxu0
  %v2097 = vadd.f32 %v2028, %v2096
  %v2098 = vpop.f32.mrf.mxu0
  %v2099 = vadd.f32 %v2030, %v2098
  %2100 = vdwg.mxu0
  %2101 = vxpose.xlu0.b32.start [1/16] %v2042, 128
  %2102 = vxpose.xlu0.b32.cont [2/16] %v2044, 128
  %2103 = vxpose.xlu0.b32.cont [3/16] %v2047, 128
  %2104 = vxpose.xlu0.b32.cont [4/16] %v2049, 128
  %2105 = vxpose.xlu0.b32.cont [5/16] %v2052, 128
  %2106 = vxpose.xlu0.b32.cont [6/16] %v2054, 128
  %2107 = vxpose.xlu0.b32.cont [7/16] %v2057, 128
  %2108 = vxpose.xlu0.b32.cont [8/16] %v2059, 128
  %2109 = vxpose.xlu0.b32.cont [9/16] %v2062, 128
  %2110 = vxpose.xlu0.b32.cont [10/16] %v2064, 128
  %2111 = vxpose.xlu0.b32.cont [11/16] %v2067, 128
  %2112 = vxpose.xlu0.b32.cont [12/16] %v2069, 128
  %2113 = vxpose.xlu0.b32.cont [13/16] %v2072, 128
  %2114 = vxpose.xlu0.b32.cont [14/16] %v2074, 128
  %2115 = vxpose.xlu0.b32.cont [15/16] %v2077, 128
  %2116 = vxpose.xlu0.b32.end [16/16] %v2079, 128
  %v2117 = vpop.trf.xlu0
  %v2118 = vpop.trf.xlu0
  %v2119 = vpop.trf.xlu0
  %v2120 = vpop.trf.xlu0
  %v2121 = vpop.trf.xlu0
  %v2122 = vpop.trf.xlu0
  %v2123 = vpop.trf.xlu0
  %v2124 = vpop.trf.xlu0
  %v2125 = vpop.trf.xlu0
  %v2126 = vpop.trf.xlu0
  %v2127 = vpop.trf.xlu0
  %v2128 = vpop.trf.xlu0
  %v2129 = vpop.trf.xlu0
  %v2130 = vpop.trf.xlu0
  %v2131 = vpop.trf.xlu0
  %v2132 = vpop.trf.xlu0
  %2133 = vxpose.xlu0.b32.start [1/16] %v2082, 128
  %2134 = vxpose.xlu0.b32.cont [2/16] %v2084, 128
  %2135 = vxpose.xlu0.b32.cont [3/16] %v2087, 128
  %2136 = vxpose.xlu0.b32.cont [4/16] %v2089, 128
  %2137 = vxpose.xlu0.b32.cont [5/16] %v2092, 128
  %2138 = vxpose.xlu0.b32.cont [6/16] %v2094, 128
  %2139 = vxpose.xlu0.b32.cont [7/16] %v2097, 128
  %2140 = vxpose.xlu0.b32.cont [8/16] %v2099, 128
  %2141 = vxpose.xlu0.b32.cont [9/16] 0.0, 128
  %2142 = vxpose.xlu0.b32.cont [10/16] 0.0, 128
  %2143 = vxpose.xlu0.b32.cont [11/16] 0.0, 128
  %2144 = vxpose.xlu0.b32.cont [12/16] 0.0, 128
  %2145 = vxpose.xlu0.b32.cont [13/16] 0.0, 128
  %2146 = vxpose.xlu0.b32.cont [14/16] 0.0, 128
  %2147 = vxpose.xlu0.b32.cont [15/16] 0.0, 128
  %2148 = vxpose.xlu0.b32.end [16/16] 0.0, 128
  %v2149 = vpop.trf.xlu0
  %v2150 = vpop.trf.xlu0
  %v2151 = vpop.trf.xlu0
  %v2152 = vpop.trf.xlu0
  %v2153 = vpop.trf.xlu0
  %v2154 = vpop.trf.xlu0
  %v2155 = vpop.trf.xlu0
  %v2156 = vpop.trf.xlu0
  %v2157 = vpop.trf.xlu0
  %v2158 = vpop.trf.xlu0
  %v2159 = vpop.trf.xlu0
  %v2160 = vpop.trf.xlu0
  %v2161 = vpop.trf.xlu0
  %v2162 = vpop.trf.xlu0
  %v2163 = vpop.trf.xlu0
  %v2164 = vpop.trf.xlu0
  %2165 = vst [vmem:[%s9] sm:$0xff] %v2117
  %2166 = vst.msk [vmem:[%s9 + $0x8] sm:$0xff] %vm1926, %v2149
  %2167 = vst [vmem:[%s9 + $0x10] sm:$0xff] %v2118
  %2168 = vst.msk [vmem:[%s9 + $0x18] sm:$0xff] %vm1926, %v2150
  %2169 = vst [vmem:[%s9 + $0x20] sm:$0xff] %v2119
  %2170 = vst.msk [vmem:[%s9 + $0x28] sm:$0xff] %vm1926, %v2151
  %2171 = vst [vmem:[%s9 + $0x30] sm:$0xff] %v2120
  %2172 = vst.msk [vmem:[%s9 + $0x38] sm:$0xff] %vm1926, %v2152
  %2173 = vst [vmem:[%s9 + $0x40] sm:$0xff] %v2121
  %2174 = vst.msk [vmem:[%s9 + $0x48] sm:$0xff] %vm1926, %v2153
  %2175 = vst [vmem:[%s9 + $0x50] sm:$0xff] %v2122
  %2176 = vst.msk [vmem:[%s9 + $0x58] sm:$0xff] %vm1926, %v2154
  %2177 = vst [vmem:[%s9 + $0x60] sm:$0xff] %v2123
  %2178 = vst.msk [vmem:[%s9 + $0x68] sm:$0xff] %vm1926, %v2155
  %2179 = vst [vmem:[%s9 + $0x70] sm:$0xff] %v2124
  %2180 = vst.msk [vmem:[%s9 + $0x78] sm:$0xff] %vm1926, %v2156
  %2181 = vst [vmem:[%s9 + $0x80] sm:$0xff] %v2125
  %2182 = vst.msk [vmem:[%s9 + $0x88] sm:$0xff] %vm1926, %v2157
  %2183 = vst [vmem:[%s9 + $0x90] sm:$0xff] %v2126
  %2184 = vst.msk [vmem:[%s9 + $0x98] sm:$0xff] %vm1926, %v2158
  %2185 = vst [vmem:[%s9 + $0xa0] sm:$0xff] %v2127
  %2186 = vst.msk [vmem:[%s9 + $0xa8] sm:$0xff] %vm1926, %v2159
  %2187 = vst [vmem:[%s9 + $0xb0] sm:$0xff] %v2128
  %2188 = vst.msk [vmem:[%s9 + $0xb8] sm:$0xff] %vm1926, %v2160
  %2189 = vst [vmem:[%s9 + $0xc0] sm:$0xff] %v2129
  %2190 = vst.msk [vmem:[%s9 + $0xc8] sm:$0xff] %vm1926, %v2161
  %2191 = vst [vmem:[%s9 + $0xd0] sm:$0xff] %v2130
  %2192 = vst.msk [vmem:[%s9 + $0xd8] sm:$0xff] %vm1926, %v2162
  %2193 = vst [vmem:[%s9 + $0xe0] sm:$0xff] %v2131
  %2194 = vst.msk [vmem:[%s9 + $0xe8] sm:$0xff] %vm1926, %v2163
  %2195 = vst [vmem:[%s9 + $0xf0] sm:$0xff] %v2132
  %2196 = vst.msk [vmem:[%s9 + $0xf8] sm:$0xff] %vm1926, %v2164
  %v2197 = vmax.f32 %v2117, 0.0
  %v2198 = vmax.f32 %v2149, 0.0
  %v2199 = vmax.f32 %v2118, 0.0
  %v2200 = vmax.f32 %v2150, 0.0
  %v2201 = vmax.f32 %v2119, 0.0
  %v2202 = vmax.f32 %v2151, 0.0
  %v2203 = vmax.f32 %v2120, 0.0
  %v2204 = vmax.f32 %v2152, 0.0
  %v2205 = vmax.f32 %v2121, 0.0
  %v2206 = vmax.f32 %v2153, 0.0
  %v2207 = vmax.f32 %v2122, 0.0
  %v2208 = vmax.f32 %v2154, 0.0
  %v2209 = vmax.f32 %v2123, 0.0
  %v2210 = vmax.f32 %v2155, 0.0
  %v2211 = vmax.f32 %v2124, 0.0
  %v2212 = vmax.f32 %v2156, 0.0
  %v2213 = vmax.f32 %v2125, 0.0
  %v2214 = vmax.f32 %v2157, 0.0
  %v2215 = vmax.f32 %v2126, 0.0
  %v2216 = vmax.f32 %v2158, 0.0
  %v2217 = vmax.f32 %v2127, 0.0
  %v2218 = vmax.f32 %v2159, 0.0
  %v2219 = vmax.f32 %v2128, 0.0
  %v2220 = vmax.f32 %v2160, 0.0
  %v2221 = vmax.f32 %v2129, 0.0
  %v2222 = vmax.f32 %v2161, 0.0
  %v2223 = vmax.f32 %v2130, 0.0
  %v2224 = vmax.f32 %v2162, 0.0
  %v2225 = vmax.f32 %v2131, 0.0
  %v2226 = vmax.f32 %v2163, 0.0
  %v2227 = vmax.f32 %v2132, 0.0
  %v2228 = vmax.f32 %v2164, 0.0
  %v2229 = vpack.c.bf16 %v2199, %v2197
  %v2230 = vpack.c.bf16 %v2200, %v2198
  %v2231 = vpack.c.bf16 %v2203, %v2201
  %v2232 = vpack.c.bf16 %v2204, %v2202
  %v2233 = vpack.c.bf16 %v2207, %v2205
  %v2234 = vpack.c.bf16 %v2208, %v2206
  %v2235 = vpack.c.bf16 %v2211, %v2209
  %v2236 = vpack.c.bf16 %v2212, %v2210
  %v2237 = vpack.c.bf16 %v2215, %v2213
  %v2238 = vpack.c.bf16 %v2216, %v2214
  %v2239 = vpack.c.bf16 %v2219, %v2217
  %v2240 = vpack.c.bf16 %v2220, %v2218
  %v2241 = vpack.c.bf16 %v2223, %v2221
  %v2242 = vpack.c.bf16 %v2224, %v2222
  %v2243 = vpack.c.bf16 %v2227, %v2225
  %v2244 = vpack.c.bf16 %v2228, %v2226
  %v2245 = vld [vmem:[%s7] sm:$0xf]
  %v2246 = vld [vmem:[%s8] sm:$0x1]
  %v2248 = vperm.slane %v2246, 0
  %2251 = vst [vmem:[#allocation1] ss:$4 sm:$0xff] %v2245
  %v2252 = vld.sshfl [vmem:[#allocation1] sm:$0xff pattern:$0x73625140]
  %v2253 = vld.sshfl [vmem:[#allocation1 + $0x8] sm:$0xff pattern:$0x73625140]
  %v2256 = vsel %vm1926, %v2230, 0
  %v2259 = vsel %vm1926, %v2232, 0
  %v2262 = vsel %vm1926, %v2234, 0
  %v2265 = vsel %vm1926, %v2236, 0
  %v2268 = vsel %vm1926, %v2238, 0
  %v2271 = vsel %vm1926, %v2240, 0
  %v2274 = vsel %vm1926, %v2242, 0
  %v2277 = vsel %vm1926, %v2244, 0
  %v2279 = vsel %vm1926, %v2253, 0
  %2281 = vmatpush.bf16.xpose.msra.mxu0 0
  %2282 = vmatpush.bf16.xpose.msra.mxu0 0
  %2283 = vmatpush.bf16.xpose.msra.mxu0 0
  %2284 = vmatpush.bf16.xpose.msra.mxu0 0
  %2285 = vmatpush.bf16.xpose.msra.mxu0 0
  %2286 = vmatpush.bf16.xpose.msra.mxu0 0
  %2287 = vmatpush.bf16.xpose.msra.mxu0 0
  %2288 = vmatpush.bf16.xpose.msra.mxu0 %v2252
  %2289 = vmatmul.bf16.gmra.mxu0 %v2229
  %v2290 = vpop.f32.mrf.mxu0
  %v2291 = vadd.f32 %v2248, %v2290
  %v2292 = vpop.f32.mrf.mxu0
  %v2293 = vadd.f32 %v2248, %v2292
  %2294 = vmatmul.bf16.gmra.mxu0 %v2231
  %v2295 = vpop.f32.mrf.mxu0
  %v2296 = vadd.f32 %v2248, %v2295
  %v2297 = vpop.f32.mrf.mxu0
  %v2298 = vadd.f32 %v2248, %v2297
  %2299 = vmatmul.bf16.gmra.mxu0 %v2233
  %v2300 = vpop.f32.mrf.mxu0
  %v2301 = vadd.f32 %v2248, %v2300
  %v2302 = vpop.f32.mrf.mxu0
  %v2303 = vadd.f32 %v2248, %v2302
  %2304 = vmatmul.bf16.gmra.mxu0 %v2235
  %v2305 = vpop.f32.mrf.mxu0
  %v2306 = vadd.f32 %v2248, %v2305
  %v2307 = vpop.f32.mrf.mxu0
  %v2308 = vadd.f32 %v2248, %v2307
  %2309 = vmatmul.bf16.gmra.mxu0 %v2237
  %v2310 = vpop.f32.mrf.mxu0
  %v2311 = vadd.f32 %v2248, %v2310
  %v2312 = vpop.f32.mrf.mxu0
  %v2313 = vadd.f32 %v2248, %v2312
  %2314 = vmatmul.bf16.gmra.mxu0 %v2239
  %v2315 = vpop.f32.mrf.mxu0
  %v2316 = vadd.f32 %v2248, %v2315
  %v2317 = vpop.f32.mrf.mxu0
  %v2318 = vadd.f32 %v2248, %v2317
  %2319 = vmatmul.bf16.gmra.mxu0 %v2241
  %v2320 = vpop.f32.mrf.mxu0
  %v2321 = vadd.f32 %v2248, %v2320
  %v2322 = vpop.f32.mrf.mxu0
  %v2323 = vadd.f32 %v2248, %v2322
  %2324 = vmatmul.bf16.gmra.mxu0 %v2243
  %v2325 = vpop.f32.mrf.mxu0
  %v2326 = vadd.f32 %v2248, %v2325
  %v2327 = vpop.f32.mrf.mxu0
  %v2328 = vadd.f32 %v2248, %v2327
  %2329 = vdwg.mxu0
  %2330 = vmatpush.bf16.xpose.msra.mxu0 0
  %2331 = vmatpush.bf16.xpose.msra.mxu0 0
  %2332 = vmatpush.bf16.xpose.msra.mxu0 0
  %2333 = vmatpush.bf16.xpose.msra.mxu0 0
  %2334 = vmatpush.bf16.xpose.msra.mxu0 0
  %2335 = vmatpush.bf16.xpose.msra.mxu0 0
  %2336 = vmatpush.bf16.xpose.msra.mxu0 0
  %2337 = vmatpush.bf16.xpose.msra.mxu0 %v2279
  %2338 = vmatmul.bf16.gmra.mxu0 %v2256
  %v2339 = vpop.f32.mrf.mxu0
  %v2340 = vadd.f32 %v2291, %v2339
  %v2341 = vpop.f32.mrf.mxu0
  %v2342 = vadd.f32 %v2293, %v2341
  %2343 = vmatmul.bf16.gmra.mxu0 %v2259
  %v2344 = vpop.f32.mrf.mxu0
  %v2345 = vadd.f32 %v2296, %v2344
  %v2346 = vpop.f32.mrf.mxu0
  %v2347 = vadd.f32 %v2298, %v2346
  %2348 = vmatmul.bf16.gmra.mxu0 %v2262
  %v2349 = vpop.f32.mrf.mxu0
  %v2350 = vadd.f32 %v2301, %v2349
  %v2351 = vpop.f32.mrf.mxu0
  %v2352 = vadd.f32 %v2303, %v2351
  %2353 = vmatmul.bf16.gmra.mxu0 %v2265
  %v2354 = vpop.f32.mrf.mxu0
  %v2355 = vadd.f32 %v2306, %v2354
  %v2356 = vpop.f32.mrf.mxu0
  %v2357 = vadd.f32 %v2308, %v2356
  %2358 = vmatmul.bf16.gmra.mxu0 %v2268
  %v2359 = vpop.f32.mrf.mxu0
  %v2360 = vadd.f32 %v2311, %v2359
  %v2361 = vpop.f32.mrf.mxu0
  %v2362 = vadd.f32 %v2313, %v2361
  %2363 = vmatmul.bf16.gmra.mxu0 %v2271
  %v2364 = vpop.f32.mrf.mxu0
  %v2365 = vadd.f32 %v2316, %v2364
  %v2366 = vpop.f32.mrf.mxu0
  %v2367 = vadd.f32 %v2318, %v2366
  %2368 = vmatmul.bf16.gmra.mxu0 %v2274
  %v2369 = vpop.f32.mrf.mxu0
  %v2370 = vadd.f32 %v2321, %v2369
  %v2371 = vpop.f32.mrf.mxu0
  %v2372 = vadd.f32 %v2323, %v2371
  %2373 = vmatmul.bf16.gmra.mxu0 %v2277
  %v2374 = vpop.f32.mrf.mxu0
  %v2375 = vadd.f32 %v2326, %v2374
  %v2376 = vpop.f32.mrf.mxu0
  %v2377 = vadd.f32 %v2328, %v2376
  %2378 = vdwg.mxu0
  %vm2379 = vcmask 31744
  %2380 = vst.msk [vmem:[%s10] sm:$0xff] %vm2379, %v2340
  %2381 = vst.msk [vmem:[%s10 + $0x8] sm:$0xff] %vm2379, %v2342
  %2382 = vst.msk [vmem:[%s10 + $0x10] sm:$0xff] %vm2379, %v2345
  %2383 = vst.msk [vmem:[%s10 + $0x18] sm:$0xff] %vm2379, %v2347
  %2384 = vst.msk [vmem:[%s10 + $0x20] sm:$0xff] %vm2379, %v2350
  %2385 = vst.msk [vmem:[%s10 + $0x28] sm:$0xff] %vm2379, %v2352
  %2386 = vst.msk [vmem:[%s10 + $0x30] sm:$0xff] %vm2379, %v2355
  %2387 = vst.msk [vmem:[%s10 + $0x38] sm:$0xff] %vm2379, %v2357
  %2388 = vst.msk [vmem:[%s10 + $0x40] sm:$0xff] %vm2379, %v2360
  %2389 = vst.msk [vmem:[%s10 + $0x48] sm:$0xff] %vm2379, %v2362
  %2390 = vst.msk [vmem:[%s10 + $0x50] sm:$0xff] %vm2379, %v2365
  %2391 = vst.msk [vmem:[%s10 + $0x58] sm:$0xff] %vm2379, %v2367
  %2392 = vst.msk [vmem:[%s10 + $0x60] sm:$0xff] %vm2379, %v2370
  %2393 = vst.msk [vmem:[%s10 + $0x68] sm:$0xff] %vm2379, %v2372
  %2394 = vst.msk [vmem:[%s10 + $0x70] sm:$0xff] %vm2379, %v2375
  %2395 = vst.msk [vmem:[%s10 + $0x78] sm:$0xff] %vm2379, %v2377
  // Predicated region
  $region38: #{cnn1_forward.1} parent=0 // pred_check
    _
  $region39: #{cnn1_forward.1} parent=0 // pred_check_branch
    %2397 = sbr.rel (0) target = $region41
  $region40: #{cnn1_forward.1} parent=0 // pred_region
    _
  $region41: #{cnn1_forward.1} parent=0 // pred_fallthru
    _
  // Predicated region
  $region42: #{cnn1_forward.1} parent=0 // pred_check
    _
  $region43: #{cnn1_forward.1} parent=0 // pred_check_branch
    %2399 = sbr.rel (0) target = $region45
  $region44: #{cnn1_forward.1} parent=0 // pred_region
    _
  $region45: #{cnn1_forward.1} parent=0 // pred_fallthru
    _
  // Predicated region
  $region46: #{cnn1_forward.1} parent=0 // pred_check
    _
  $region47: #{cnn1_forward.1} parent=0 // pred_check_branch
    %2401 = sbr.rel (0) target = $region49
  $region48: #{cnn1_forward.1} parent=0 // pred_region
    _
  $region49: #{cnn1_forward.1} parent=0 // pred_fallthru
    _
  // Predicated region
  $region50: #{cnn1_forward.1} parent=0 // pred_check
    _
  $region51: #{cnn1_forward.1} parent=0 // pred_check_branch
    %2403 = sbr.rel (0) target = $region53
  $region52: #{cnn1_forward.1} parent=0 // pred_region
    _
  $region53: #{cnn1_forward.1} parent=0 // pred_fallthru
    _

</llo_original>
